<compile_context>
chip_gen: v6e
topology: v6e:2x2x1
jax: 0.10.0
libtpu: 0.0.40
codegen_flags: <defaults>
</compile_context>

<pallas_src>
import functools

import jax
import jax.numpy as jnp
from jax import lax
from jax.experimental import pallas as pl
from jax.experimental.pallas import tpu as pltpu


# ---------------------------------------------------------------------------
# Kernels
# ---------------------------------------------------------------------------
def _gat_attention_kernel(f_src_ref, f_dst_ref, adj_ref, wh_ref, out_ref,
                          *, alpha, matmul_dtype):
    """One query-row tile of a GraphAttention layer.

    f_src_ref : (TM, 1)    Wh[i] . a_src            (this row tile)
    f_dst_ref : (1, N)     Wh[j] . a_dst            (all nodes)
    adj_ref   : (TM, N)    int8 binary adjacency    (this row tile)
    wh_ref    : (N, Fout)  projected features       (all nodes)
    out_ref   : (TM, Fout) ELU(att @ Wh)            (this row tile)
    """
    # e[i, j] = f_src[i] + f_dst[j]  -- pure VPU broadcast add (no K=1 matmul).
    e = f_src_ref[...] + f_dst_ref[...]                       # (TM, N)
    e = jnp.where(e > 0, e, alpha * e)                        # LeakyReLU

    adjf = adj_ref[...].astype(jnp.float32)                   # int8 mask -> f32
    att = jnp.where(adjf > 0.0, e, jnp.full_like(e, -9e15))

    # Row-wise numerically-stable softmax; reciprocal on the EUP.
    m = jnp.max(att, axis=1, keepdims=True)
    p = jnp.exp(att - m)
    denom = jnp.sum(p, axis=1, keepdims=True)
    att = p * pl.reciprocal(denom, approx=True)

    # TODO(synk): F.dropout(attention) skipped (inference / training=False).

    wh = wh_ref[...]
    hp = jnp.dot(att.astype(matmul_dtype), wh.astype(matmul_dtype),
                 preferred_element_type=jnp.float32)          # (TM, Fout) MXU

    # ELU, with the negative branch clamped so exp never overflows.
    out_ref[...] = jnp.where(hp > 0, hp, jnp.exp(jnp.minimum(hp, 0.0)) - 1.0)


def _sigmoid_gram_kernel(z_tile_ref, z_full_ref, out_ref):
    """One row tile of ZZ = sigmoid(Z @ Z^T), sigmoid lowered through tanh."""
    zz = lax.dot_general(z_tile_ref[...], z_full_ref[...],
                         (((1,), (1,)), ((), ())),
                         preferred_element_type=jnp.float32)  # (TM, N)
    out_ref[...] = 0.5 * jnp.tanh(0.5 * zz) + 0.5


# ---------------------------------------------------------------------------
# Wrappers
# ---------------------------------------------------------------------------
def _pick_tile(n, requested):
    """Largest row tile <= requested that divides n and is sublane-friendly."""
    requested = min(requested, n)
    if n % requested == 0 and (requested % 8 == 0 or requested == n):
        return requested
    for t in range(requested - requested % 8, 0, -8):
        if t > 0 and n % t == 0:
            return t
    return n  # fall back to a single full-size block (always legal)


def gat_attention_layer(h, w, a_src, a_dst, adj_i8, *, alpha, tm=128,
                        matmul_dtype=jnp.float32):
    """One GraphAttention layer, row-tiled over the adjacency."""
    n = h.shape[0]
    fout = w.shape[1]
    tm = _pick_tile(n, tm)

    # Fold W, a_src, a_dst into ONE projection matmul (review item #8):
    # h @ [W | W a_src^T | W a_dst^T]  ->  Wh, f_src, f_dst in a single MXU pass.
    wa = jnp.concatenate([w, w @ a_src.T, w @ a_dst.T], axis=1)   # (Fin, Fout+2)
    whe = jnp.dot(h, wa, preferred_element_type=jnp.float32)      # (N, Fout+2)
    wh = whe[:, :fout]                                            # (N, Fout)
    f_src = whe[:, fout:fout + 1]                                 # (N, 1)
    f_dst_row = whe[:, fout + 1:fout + 2].T                       # (1, N)

    kernel = functools.partial(_gat_attention_kernel, alpha=alpha,
                               matmul_dtype=matmul_dtype)
    return pl.pallas_call(
        kernel,
        out_shape=jax.ShapeDtypeStruct((n, fout), jnp.float32),
        grid_spec=pltpu.PrefetchScalarGridSpec(
            num_scalar_prefetch=0,
            grid=(n // tm,),
            in_specs=[
                pl.BlockSpec((tm, 1), lambda i: (i, 0)),      # f_src   (row tile)
                pl.BlockSpec((1, n), lambda i: (0, 0)),       # f_dst   (all nodes)
                pl.BlockSpec((tm, n), lambda i: (i, 0)),      # adj     (row tile, int8)
                pl.BlockSpec((n, fout), lambda i: (0, 0)),    # Wh      (all nodes)
            ],
            out_specs=pl.BlockSpec((tm, fout), lambda i: (i, 0)),
        ),
        compiler_params=pltpu.CompilerParams(
            dimension_semantics=("parallel",)),
    )(f_src, f_dst_row, adj_i8, wh)


def sigmoid_gram(z, *, tm=128):
    """ZZ = sigmoid(Z @ Z^T), row-tiled."""
    n, c = z.shape
    tm = _pick_tile(n, tm)
    return pl.pallas_call(
        _sigmoid_gram_kernel,
        out_shape=jax.ShapeDtypeStruct((n, n), jnp.float32),
        grid_spec=pltpu.PrefetchScalarGridSpec(
            num_scalar_prefetch=0,
            grid=(n // tm,),
            in_specs=[
                pl.BlockSpec((tm, c), lambda i: (i, 0)),      # Z row tile
                pl.BlockSpec((n, c), lambda i: (0, 0)),       # Z (all rows)
            ],
            out_specs=pl.BlockSpec((tm, n), lambda i: (i, 0)),
        ),
        compiler_params=pltpu.CompilerParams(
            dimension_semantics=("parallel",)),
    )(z, z)


def gat_forward(x, adj, params, *, alpha, tm=128, matmul_dtype=jnp.float32):
    """Full GAT.forward: two attention layers, then sigmoid(Z Z^T)."""
    # Binary adjacency as int8: 4x less HBM traffic for the dominant N*N stream.
    adj_i8 = (adj != 0).astype(jnp.int8)

    z = gat_attention_layer(x, params["w1"], params["a1_src"], params["a1_dst"],
                            adj_i8, alpha=alpha, tm=tm, matmul_dtype=matmul_dtype)
    z = gat_attention_layer(z, params["w2"], params["a2_src"], params["a2_dst"],
                            adj_i8, alpha=alpha, tm=tm, matmul_dtype=matmul_dtype)
    # TODO(synk): np.savetxt('./embedding.txt', Z) is host file I/O; skipped.
    zz = sigmoid_gram(z, tm=tm)
    return zz, z


# ---------------------------------------------------------------------------
# Pure-JAX reference (PyTorch semantics) for correctness check
# ---------------------------------------------------------------------------
def _ref_layer(h, w, a_src, a_dst, adj, alpha):
    wh = h @ w
    e = wh @ a_src.T + (wh @ a_dst.T).T
    e = jnp.where(e > 0, e, alpha * e)
    att = jnp.where(adj > 0, e, -9e15)
    att = jax.nn.softmax(att, axis=1)
    hp = att @ wh
    return jnp.where(hp > 0, hp, jnp.expm1(hp))


def _ref_forward(x, adj, p, alpha):
    z = _ref_layer(x, p["w1"], p["a1_src"], p["a1_dst"], adj, alpha)
    z = _ref_layer(z, p["w2"], p["a2_src"], p["a2_dst"], adj, alpha)
    return jax.nn.sigmoid(z @ z.T)


# ---------------------------------------------------------------------------
def _xavier(key, shape, gain=1.414):
    fan_in, fan_out = shape[0], shape[1]
    bound = gain * (6.0 / (fan_in + fan_out)) ** 0.5
    return jax.random.uniform(key, shape, jnp.float32, -bound, bound)


if __name__ == "__main__":
    # Lane-dense demo problem: N nodes, nfeat -> ndim -> nclass, all x128.
    N, NFEAT, NDIM, NCLASS = 256, 128, 128, 128
    ALPHA = 0.2   # LeakyReLU slope
    TM = 128      # query-row tile (grid = N // TM = 2)

    key = jax.random.PRNGKey(0)
    kx, kadj, k1, k2, k3, k4, k5, k6 = jax.random.split(key, 8)

    x = jax.random.normal(kx, (N, NFEAT), jnp.float32)

    # Symmetric random adjacency with self-loops (binary float mask, as in torch).
    a = (jax.random.uniform(kadj, (N, N)) > 0.6).astype(jnp.float32)
    adj = jnp.clip(a + a.T + jnp.eye(N, dtype=jnp.float32), 0.0, 1.0)

    params = {
        "w1": _xavier(k1, (NFEAT, NDIM)),
        "a1_src": _xavier(k2, (1, NDIM)),
        "a1_dst": _xavier(k3, (1, NDIM)),
        "w2": _xavier(k4, (NDIM, NCLASS)),
        "a2_src": _xavier(k5, (1, NCLASS)),
        "a2_dst": _xavier(k6, (1, NCLASS)),
    }

    fwd = jax.jit(functools.partial(gat_forward, alpha=ALPHA, tm=TM))
    zz, emb = fwd(x, adj, params)
    zz = jax.block_until_ready(zz)

    ref = _ref_forward(x, adj, params, ALPHA)
    assert zz.shape == (N, N)
    assert emb.shape == (N, NCLASS)
    assert bool(jnp.isfinite(emb).all())
    # Tolerance accommodates the EUP approximate reciprocal in the softmax.
    assert jnp.allclose(zz, ref, atol=5e-3, rtol=5e-3), "mismatch vs reference"

    print("KERNEL_OK")
</pallas_src>

<mosaic_0001>
module attributes {stable_mosaic.version = 11 : i64} {
  func.func @_gat_attention_kernel(%arg0: i32, %arg1: memref<128x1xf32, #tpu.memory_space<vmem>>, %arg2: memref<1x256xf32, #tpu.memory_space<vmem>>, %arg3: memref<128x256xi8, #tpu.memory_space<vmem>>, %arg4: memref<256x128xf32, #tpu.memory_space<vmem>>, %arg5: memref<128x128xf32, #tpu.memory_space<vmem>>) attributes {dimension_semantics = [#tpu.dimension_semantics<parallel>], iteration_bounds = array<i64: 2>, scalar_prefetch = 0 : i64, scratch_operands = 0 : i64, tpu.core_type = #tpu.core_type<tc>, window_params = [{transform_indices = @transform_0, window_bounds = array<i64: 128, 1>}, {pipeline_mode = #tpu.pipeline_mode<synchronous>, transform_indices = @transform_1, window_bounds = array<i64: 1, 256>}, {transform_indices = @transform_2, window_bounds = array<i64: 128, 256>}, {pipeline_mode = #tpu.pipeline_mode<synchronous>, transform_indices = @transform_3, window_bounds = array<i64: 256, 128>}, {transform_indices = @transform_4, window_bounds = array<i64: 128, 128>}]} {
    %c0 = arith.constant 0 : index
    %c0_0 = arith.constant 0 : index
    %0 = vector.load %arg1[%c0, %c0_0] : memref<128x1xf32, #tpu.memory_space<vmem>>, vector<128x1xf32>
    %c0_1 = arith.constant 0 : index
    %c0_2 = arith.constant 0 : index
    %1 = vector.load %arg2[%c0_1, %c0_2] : memref<1x256xf32, #tpu.memory_space<vmem>>, vector<1x256xf32>
    %2 = vector.broadcast %0 : vector<128x1xf32> to vector<128x256xf32>
    %3 = vector.broadcast %1 : vector<1x256xf32> to vector<128x256xf32>
    %4 = arith.addf %2, %3 : vector<128x256xf32>
    %cst = arith.constant 0.000000e+00 : f32
    %5 = vector.broadcast %cst : f32 to vector<128x256xf32>
    %6 = arith.cmpf ogt, %4, %5 : vector<128x256xf32>
    %cst_3 = arith.constant 2.000000e-01 : f32
    %7 = vector.broadcast %cst_3 : f32 to vector<128x256xf32>
    %8 = arith.mulf %7, %4 : vector<128x256xf32>
    %9 = arith.select %6, %4, %8 : vector<128x256xi1>, vector<128x256xf32>
    %c0_4 = arith.constant 0 : index
    %c0_5 = arith.constant 0 : index
    %10 = vector.load %arg3[%c0_4, %c0_5] : memref<128x256xi8, #tpu.memory_space<vmem>>, vector<128x256xi8>
    %11 = arith.sitofp %10 : vector<128x256xi8> to vector<128x256xf32>
    %cst_6 = arith.constant 0.000000e+00 : f32
    %12 = vector.broadcast %cst_6 : f32 to vector<128x256xf32>
    %13 = arith.cmpf ogt, %11, %12 : vector<128x256xf32>
    %cst_7 = arith.constant -9.000000e+15 : f32
    %14 = vector.broadcast %cst_7 : f32 to vector<128x256xf32>
    %15 = arith.select %13, %9, %14 : vector<128x256xi1>, vector<128x256xf32>
    %cst_8 = arith.constant dense<0xFF800000> : vector<128xf32>
    %16 = vector.multi_reduction <maximumf>, %15, %cst_8 [1] : vector<128x256xf32> to vector<128xf32>
    %17 = vector.shape_cast %16 : vector<128xf32> to vector<128x1xf32>
    %18 = vector.broadcast %17 : vector<128x1xf32> to vector<128x256xf32>
    %19 = arith.subf %15, %18 : vector<128x256xf32>
    %20 = math.exp %19 : vector<128x256xf32>
    %cst_9 = arith.constant dense<0.000000e+00> : vector<128xf32>
    %21 = vector.multi_reduction <add>, %20, %cst_9 [1] : vector<128x256xf32> to vector<128xf32>
    %22 = vector.shape_cast %21 : vector<128xf32> to vector<128x1xf32>
    %23 = tpu.reciprocal %22 {approx = true} : vector<128x1xf32> -> vector<128x1xf32>
    %24 = vector.broadcast %23 : vector<128x1xf32> to vector<128x256xf32>
    %25 = arith.mulf %20, %24 : vector<128x256xf32>
    %c0_10 = arith.constant 0 : index
    %c0_11 = arith.constant 0 : index
    %26 = vector.load %arg4[%c0_10, %c0_11] : memref<256x128xf32, #tpu.memory_space<vmem>>, vector<256x128xf32>
    %cst_12 = arith.constant dense<0.000000e+00> : vector<128x128xf32>
    %27 = tpu.matmul %25, %26, %cst_12 {dimension_numbers = #tpu.dot_dimension_numbers<[1], [0], [0], [1], [0, 0, 1, 1], [], []>} : vector<128x256xf32>, vector<256x128xf32>, vector<128x128xf32> -> vector<128x128xf32>
    %cst_13 = arith.constant 0.000000e+00 : f32
    %28 = vector.broadcast %cst_13 : f32 to vector<128x128xf32>
    %29 = arith.cmpf ogt, %27, %28 : vector<128x128xf32>
    %cst_14 = arith.constant 0.000000e+00 : f32
    %30 = vector.broadcast %cst_14 : f32 to vector<128x128xf32>
    %31 = arith.minimumf %27, %30 : vector<128x128xf32>
    %32 = math.exp %31 : vector<128x128xf32>
    %cst_15 = arith.constant 1.000000e+00 : f32
    %33 = vector.broadcast %cst_15 : f32 to vector<128x128xf32>
    %34 = arith.subf %32, %33 : vector<128x128xf32>
    %35 = arith.select %29, %27, %34 : vector<128x128xi1>, vector<128x128xf32>
    %c0_16 = arith.constant 0 : index
    %c0_17 = arith.constant 0 : index
    %36 = vector.load %arg5[%c0_16, %c0_17] : memref<128x128xf32, #tpu.memory_space<vmem>>, vector<128x128xf32>
    tpu.vector_store %arg5[%c0_16, %c0_17], %35 {strides = array<i32>} : memref<128x128xf32, #tpu.memory_space<vmem>>, vector<128x128xf32>,
    return
  }
  func.func @transform_0(%arg0: i32) -> (i32, i32) {
    %c0_i32 = arith.constant 0 : i32
    %c0_i32_0 = arith.constant 0 : i32
    return %arg0, %c0_i32 : i32, i32
  }
  func.func @transform_1(%arg0: i32) -> (i32, i32) {
    %c0_i32 = arith.constant 0 : i32
    %c0_i32_0 = arith.constant 0 : i32
    %c0_i32_1 = arith.constant 0 : i32
    return %c0_i32, %c0_i32_0 : i32, i32
  }
  func.func @transform_2(%arg0: i32) -> (i32, i32) {
    %c0_i32 = arith.constant 0 : i32
    %c0_i32_0 = arith.constant 0 : i32
    return %arg0, %c0_i32 : i32, i32
  }
  func.func @transform_3(%arg0: i32) -> (i32, i32) {
    %c0_i32 = arith.constant 0 : i32
    %c0_i32_0 = arith.constant 0 : i32
    %c0_i32_1 = arith.constant 0 : i32
    return %c0_i32, %c0_i32_0 : i32, i32
  }
  func.func @transform_4(%arg0: i32) -> (i32, i32) {
    %c0_i32 = arith.constant 0 : i32
    %c0_i32_0 = arith.constant 0 : i32
    return %arg0, %c0_i32 : i32, i32
  }
}

module attributes {stable_mosaic.version = 11 : i64} {
  func.func @_sigmoid_gram_kernel(%arg0: i32, %arg1: memref<128x128xf32, #tpu.memory_space<vmem>>, %arg2: memref<256x128xf32, #tpu.memory_space<vmem>>, %arg3: memref<128x256xf32, #tpu.memory_space<vmem>>) attributes {dimension_semantics = [#tpu.dimension_semantics<parallel>], iteration_bounds = array<i64: 2>, scalar_prefetch = 0 : i64, scratch_operands = 0 : i64, tpu.core_type = #tpu.core_type<tc>, window_params = [{transform_indices = @transform_0, window_bounds = array<i64: 128, 128>}, {pipeline_mode = #tpu.pipeline_mode<synchronous>, transform_indices = @transform_1, window_bounds = array<i64: 256, 128>}, {transform_indices = @transform_2, window_bounds = array<i64: 128, 256>}]} {
    %c0 = arith.constant 0 : index
    %c0_0 = arith.constant 0 : index
    %0 = vector.load %arg1[%c0, %c0_0] : memref<128x128xf32, #tpu.memory_space<vmem>>, vector<128x128xf32>
    %c0_1 = arith.constant 0 : index
    %c0_2 = arith.constant 0 : index
    %1 = vector.load %arg2[%c0_1, %c0_2] : memref<256x128xf32, #tpu.memory_space<vmem>>, vector<256x128xf32>
    %cst = arith.constant dense<0.000000e+00> : vector<128x256xf32>
    %2 = tpu.matmul %0, %1, %cst {dimension_numbers = #tpu.dot_dimension_numbers<[1], [1], [0], [0], [0, 0, 1, 0], [], []>} : vector<128x128xf32>, vector<256x128xf32>, vector<128x256xf32> -> vector<128x256xf32>
    %cst_3 = arith.constant 5.000000e-01 : f32
    %3 = vector.broadcast %cst_3 : f32 to vector<128x256xf32>
    %4 = arith.mulf %3, %2 : vector<128x256xf32>
    %5 = math.tanh %4 : vector<128x256xf32>
    %cst_4 = arith.constant 5.000000e-01 : f32
    %6 = vector.broadcast %cst_4 : f32 to vector<128x256xf32>
    %7 = arith.mulf %6, %5 : vector<128x256xf32>
    %cst_5 = arith.constant 5.000000e-01 : f32
    %8 = vector.broadcast %cst_5 : f32 to vector<128x256xf32>
    %9 = arith.addf %7, %8 : vector<128x256xf32>
    %c0_6 = arith.constant 0 : index
    %c0_7 = arith.constant 0 : index
    %10 = vector.load %arg3[%c0_6, %c0_7] : memref<128x256xf32, #tpu.memory_space<vmem>>, vector<128x256xf32>
    tpu.vector_store %arg3[%c0_6, %c0_7], %9 {strides = array<i32>} : memref<128x256xf32, #tpu.memory_space<vmem>>, vector<128x256xf32>,
    return
  }
  func.func @transform_0(%arg0: i32) -> (i32, i32) {
    %c0_i32 = arith.constant 0 : i32
    %c0_i32_0 = arith.constant 0 : i32
    return %arg0, %c0_i32 : i32, i32
  }
  func.func @transform_1(%arg0: i32) -> (i32, i32) {
    %c0_i32 = arith.constant 0 : i32
    %c0_i32_0 = arith.constant 0 : i32
    %c0_i32_1 = arith.constant 0 : i32
    return %c0_i32, %c0_i32_0 : i32, i32
  }
  func.func @transform_2(%arg0: i32) -> (i32, i32) {
    %c0_i32 = arith.constant 0 : i32
    %c0_i32_0 = arith.constant 0 : i32
    return %arg0, %c0_i32 : i32, i32
  }
}

</mosaic_0001>

<llo_original>
// kernel: gat_forward.5
$region0: #{gat_forward.5}
  #allocation0 [shape = 'u32[]', space=smem, size = 0x4, offset = 0x4, fixed_abs, tag = 'smem constant byte address 0x4 - core index']
  #allocation1 [shape = 'u32[144,128]{1,0:T(1,128)}', space=vmem, size = 0x12000, scoped, tag = 'internal scratch']
  %s0 = inlined_call_operand.vmem [shape: f32[256,128], index: 0, kind: input, shape index: {}, may-alias: {0,1}]
  %s1 = inlined_call_operand.vmem [shape: f32[256,128], index: 1, kind: input, shape index: {}, may-alias: {0,1}]
  %s2 = inlined_call_operand.hbm [shape: f32[256,256], index: 2, kind: output, shape index: {}]
  %s3 = sld [smem:[#allocation0]]
  $region41: #{gat_forward.5} parent=0
    _
  %s5 = ssub.s32 1, %s3
  %s6 = scalar_select 0, %s5, %s3
  $region1: #{gat_forward.5} parent=0
    #allocation2 [shape = 'u8[262144]{0}', space=vmem, size = 0x40000, scoped, tag = 'output window, operand 0']
    #allocation3 [shape = 's32[2]{0}', space=sflag, size = 0x8, scoped, tag = 'scoped memory for gat_forward.5']
    %7 = vsyncpa [#allocation3], 0
    %s8 = scalar_lea.sflag [#allocation3], 1
    %9 = vsyncpa %s8, 0
    loop: start=0, step=1, limit=4
    $region2: #{gat_forward.5} parent=1 // loop_pre_header
      _
    $region3: #{gat_forward.5} parent=1 // loop_header
      %s11 = sphi 0, %s15
      %p12 = scmp.ge.s32.totalorder %s11, 4
      %s21 = sphi 0, %s23
      %s24 = sphi 0, %s21
      %s25 = sphi 0, %s24
      %s41 = sphi 0, %s25
      %s45 = sphi 0, %s45
      %s47 = sphi 0, %s45
      %s48 = sphi 0, %s47
      %s62 = sphi 0, %s48
      %s68 = sphi 0, %s70
      %s71 = sphi 0, %s68
      %s72 = sphi 0, %s71
      %s88 = sphi 0, %s72
    $region4: #{gat_forward.5} parent=1 // loop_header_branch
      %14 = sbr.rel (%p12) target = $region8
    $region5: #{gat_forward.5} parent=1 // loop_body
      %s16 = ssub.s32 %s11, 1
      %s17 = ssub.s32 %s11, 2
      %s18 = sadd.s32 %s11, 1
      %s19 = ssub.s32 %s11, %s18
      %p20 = scmp.eq.s32.totalorder %s19, 0
      %s22 = sadd.s32 %s21, 1
      %s23 = scalar_select %p20, %s21, %s22
      %p26 = pneg %p20
      %p27 = scmp.eq.s32.totalorder %s11, 1
      %p28 = por %p26, %p27
      %p29 = scmp.ne.s32.totalorder %s21, %s24
      %p30 = scmp.eq.s32.totalorder %s11, 0
      %p31 = por %p29, %p30
      %p32 = scmp.ne.s32.totalorder %s21, %s24
      %p33 = scmp.eq.s32.totalorder %s16, 1
      %p34 = por %p32, %p33
      %p35 = scmp.ne.s32.totalorder %s24, %s25
      %p36 = scmp.eq.s32.totalorder %s16, 0
      %p37 = por %p35, %p36
      %p38 = scmp.ne.s32.totalorder %s24, %s25
      %p39 = scmp.eq.s32.totalorder %s17, 1
      %p40 = por %p38, %p39
      %p42 = scmp.ne.s32.totalorder %s25, %s41
      %p43 = scmp.eq.s32.totalorder %s17, 0
      %p44 = por %p42, %p43
      %s46 = sadd.s32 %s45, 1
      %p49 = scmp.eq.s32.totalorder %s11, 1
      %p50 = scmp.ne.s32.totalorder %s45, %s47
      %p51 = scmp.eq.s32.totalorder %s11, 0
      %p52 = por %p50, %p51
      %p53 = scmp.ne.s32.totalorder %s45, %s47
      %p54 = scmp.eq.s32.totalorder %s16, 1
      %p55 = por %p53, %p54
      %p56 = scmp.ne.s32.totalorder %s47, %s48
      %p57 = scmp.eq.s32.totalorder %s16, 0
      %p58 = por %p56, %p57
      %p59 = scmp.ne.s32.totalorder %s47, %s48
      %p60 = scmp.eq.s32.totalorder %s17, 1
      %p61 = por %p59, %p60
      %p63 = scmp.ne.s32.totalorder %s48, %s62
      %p64 = scmp.eq.s32.totalorder %s17, 0
      %p65 = por %p63, %p64
      %s66 = ssub.s32 %s11, %s18
      %p67 = scmp.eq.s32.totalorder %s66, 0
      %s69 = sadd.s32 %s68, 1
      %s70 = scalar_select %p67, %s68, %s69
      %p73 = pneg %p67
      %p74 = scmp.eq.s32.totalorder %s11, 1
      %p75 = por %p73, %p74
      %p76 = scmp.ne.s32.totalorder %s68, %s71
      %p77 = scmp.eq.s32.totalorder %s11, 0
      %p78 = por %p76, %p77
      %p79 = scmp.ne.s32.totalorder %s68, %s71
      %p80 = scmp.eq.s32.totalorder %s16, 1
      %p81 = por %p79, %p80
      %p82 = scmp.ne.s32.totalorder %s71, %s72
      %p83 = scmp.eq.s32.totalorder %s16, 0
      %p84 = por %p82, %p83
      %p85 = scmp.ne.s32.totalorder %s71, %s72
      %p86 = scmp.eq.s32.totalorder %s17, 1
      %p87 = por %p85, %p86
      %p89 = scmp.ne.s32.totalorder %s72, %s88
      %p90 = scmp.eq.s32.totalorder %s17, 0
      %p91 = por %p89, %p90
      %p92 = scmp.le.s32.totalorder 1, %s11
      %p93 = scmp.lt.s32.totalorder %s11, 3
      %p94 = pnand %p92, %p93
      %p95 = pneg %p94
      // Predicated region
      $region9: #{gat_forward.5} parent=5 // pred_check
        _
      $region10: #{gat_forward.5} parent=5 // pred_check_branch
        %97 = sbr.rel (%p94) target = $region12
      $region11: #{gat_forward.5} parent=5 // pred_region
        %s98 = ssub.s32 %s11, 1
        // Predicated region
        $region13: #{gat_forward.5} parent=11 // pred_check
          %p99 = pneg %p58
        $region14: #{gat_forward.5} parent=11 // pred_check_branch
          %101 = sbr.rel (%p99) target = $region16
        $region15: #{gat_forward.5} parent=11 // pred_region
          _
        $region16: #{gat_forward.5} parent=11 // pred_fallthru
          _
      $region12: #{gat_forward.5} parent=5 // pred_fallthru
        _
      %p102 = scmp.lt.s32.totalorder %s11, 2
      // Predicated region
      $region17: #{gat_forward.5} parent=5 // pred_check
        %p103 = pneg %p102
      $region18: #{gat_forward.5} parent=5 // pred_check_branch
        %105 = sbr.rel (%p103) target = $region20
      $region19: #{gat_forward.5} parent=5 // pred_region
        // Predicated region
        $region21: #{gat_forward.5} parent=19 // pred_check
          %p106 = pneg %p31
        $region22: #{gat_forward.5} parent=19 // pred_check_branch
          %108 = sbr.rel (%p106) target = $region24
        $region23: #{gat_forward.5} parent=19 // pred_region
          %s109 = smul.u32 16, %s11
          %p110 = scmp.lt.s32.totalorder %s109, 31
          %s111 = scalar_select %p110, %s109, 31
          %s112 = smul.addr %s111, 8
          %s113 = scalar_lea.vmem %s0, %s112
          %s114 = smul.u32 16, %s11
        $region24: #{gat_forward.5} parent=19 // pred_fallthru
          _
      $region20: #{gat_forward.5} parent=5 // pred_fallthru
        _
      %p115 = scmp.le.s32.totalorder 1, %s11
      %p116 = scmp.lt.s32.totalorder %s11, 3
      %p117 = pnand %p115, %p116
      %p118 = pneg %p117
      // Predicated region
      $region25: #{gat_forward.5} parent=5 // pred_check
        _
      $region26: #{gat_forward.5} parent=5 // pred_check_branch
        %120 = sbr.rel (%p117) target = $region28
      $region27: #{gat_forward.5} parent=5 // pred_region
        %s121 = ssub.s32 %s11, 1
        %s122 = smul.u32 16, %s16
        %p123 = scmp.lt.s32.totalorder %s122, 31
        %s124 = scalar_select %p123, %s122, 31
        %s125 = smul.addr %s124, 8
        %s126 = scalar_lea.vmem %s0, %s125
        %p127 = pneg %p37
        %p128 = pneg %p34
        %p129 = pneg %p58
        %p130 = pneg %p55
        %p131 = pneg %p84
        %p132 = pneg %p81
        %s133 = sand.u32 %s71, 1
        %s134 = scalar_lea.sflag [#allocation3], %s133
        %s135 = sand.u32 %s71, 1
        %s136 = smul.addr %s135, 256
        %s137 = scalar_lea.vmem [#allocation2], %s136
        %s138 = smul.u32 16, %s16
        %p139 = scmp.lt.s32.totalorder %s138, 31
        %s140 = scalar_select %p139, %s138, 31
        %s141 = smul.addr %s140, 8
        %s142 = scalar_lea.vmem %s0, %s141
        %s143 = smul.u32 16, %s16
        %s144 = smul.u32 16, %s16
        %v145 = vld [vmem:[%s142] sm:$0xff]
        %v146 = vld [vmem:[%s142 + $0x8] sm:$0xff]
        %v147 = vld [vmem:[%s142 + $0x10] sm:$0xff]
        %v148 = vld [vmem:[%s142 + $0x18] sm:$0xff]
        %v149 = vld [vmem:[%s142 + $0x20] sm:$0xff]
        %v150 = vld [vmem:[%s142 + $0x28] sm:$0xff]
        %v151 = vld [vmem:[%s142 + $0x30] sm:$0xff]
        %v152 = vld [vmem:[%s142 + $0x38] sm:$0xff]
        %v153 = vld [vmem:[%s142 + $0x40] sm:$0xff]
        %v154 = vld [vmem:[%s142 + $0x48] sm:$0xff]
        %v155 = vld [vmem:[%s142 + $0x50] sm:$0xff]
        %v156 = vld [vmem:[%s142 + $0x58] sm:$0xff]
        %v157 = vld [vmem:[%s142 + $0x60] sm:$0xff]
        %v158 = vld [vmem:[%s142 + $0x68] sm:$0xff]
        %v159 = vld [vmem:[%s142 + $0x70] sm:$0xff]
        %v160 = vld [vmem:[%s142 + $0x78] sm:$0xff]
        %v161 = vld [vmem:[%s1] sm:$0xff]
        %v162 = vld [vmem:[%s1 + $0x8] sm:$0xff]
        %v163 = vld [vmem:[%s1 + $0x10] sm:$0xff]
        %v164 = vld [vmem:[%s1 + $0x18] sm:$0xff]
        %v165 = vld [vmem:[%s1 + $0x20] sm:$0xff]
        %v166 = vld [vmem:[%s1 + $0x28] sm:$0xff]
        %v167 = vld [vmem:[%s1 + $0x30] sm:$0xff]
        %v168 = vld [vmem:[%s1 + $0x38] sm:$0xff]
        %v169 = vld [vmem:[%s1 + $0x40] sm:$0xff]
        %v170 = vld [vmem:[%s1 + $0x48] sm:$0xff]
        %v171 = vld [vmem:[%s1 + $0x50] sm:$0xff]
        %v172 = vld [vmem:[%s1 + $0x58] sm:$0xff]
        %v173 = vld [vmem:[%s1 + $0x60] sm:$0xff]
        %v174 = vld [vmem:[%s1 + $0x68] sm:$0xff]
        %v175 = vld [vmem:[%s1 + $0x70] sm:$0xff]
        %v176 = vld [vmem:[%s1 + $0x78] sm:$0xff]
        %v177 = vld [vmem:[%s1 + $0x80] sm:$0xff]
        %v178 = vld [vmem:[%s1 + $0x88] sm:$0xff]
        %v179 = vld [vmem:[%s1 + $0x90] sm:$0xff]
        %v180 = vld [vmem:[%s1 + $0x98] sm:$0xff]
        %v181 = vld [vmem:[%s1 + $0xa0] sm:$0xff]
        %v182 = vld [vmem:[%s1 + $0xa8] sm:$0xff]
        %v183 = vld [vmem:[%s1 + $0xb0] sm:$0xff]
        %v184 = vld [vmem:[%s1 + $0xb8] sm:$0xff]
        %v185 = vld [vmem:[%s1 + $0xc0] sm:$0xff]
        %v186 = vld [vmem:[%s1 + $0xc8] sm:$0xff]
        %v187 = vld [vmem:[%s1 + $0xd0] sm:$0xff]
        %v188 = vld [vmem:[%s1 + $0xd8] sm:$0xff]
        %v189 = vld [vmem:[%s1 + $0xe0] sm:$0xff]
        %v190 = vld [vmem:[%s1 + $0xe8] sm:$0xff]
        %v191 = vld [vmem:[%s1 + $0xf0] sm:$0xff]
        %v192 = vld [vmem:[%s1 + $0xf8] sm:$0xff]
        %193 = vmatprep.subr.mxu0 0.0
        %194 = vmatpush1.xpose.msra.mxu0 %v176
        %195 = vmatprep.subr.mxu0 0.0
        %196 = vmatpush1.xpose.msra.mxu0 %v175
        %197 = vmatprep.subr.mxu0 0.0
        %198 = vmatpush1.xpose.msra.mxu0 %v174
        %199 = vmatprep.subr.mxu0 0.0
        %200 = vmatpush1.xpose.msra.mxu0 %v173
        %201 = vmatprep.subr.mxu0 0.0
        %202 = vmatpush1.xpose.msra.mxu0 %v172
        %203 = vmatprep.subr.mxu0 0.0
        %204 = vmatpush1.xpose.msra.mxu0 %v171
        %205 = vmatprep.subr.mxu0 0.0
        %206 = vmatpush1.xpose.msra.mxu0 %v170
        %207 = vmatprep.subr.mxu0 0.0
        %208 = vmatpush1.xpose.msra.mxu0 %v169
        %209 = vmatprep.subr.mxu0 0.0
        %210 = vmatpush1.xpose.msra.mxu0 %v168
        %211 = vmatprep.subr.mxu0 0.0
        %212 = vmatpush1.xpose.msra.mxu0 %v167
        %213 = vmatprep.subr.mxu0 0.0
        %214 = vmatpush1.xpose.msra.mxu0 %v166
        %215 = vmatprep.subr.mxu0 0.0
        %216 = vmatpush1.xpose.msra.mxu0 %v165
        %217 = vmatprep.subr.mxu0 0.0
        %218 = vmatpush1.xpose.msra.mxu0 %v164
        %219 = vmatprep.subr.mxu0 0.0
        %220 = vmatpush1.xpose.msra.mxu0 %v163
        %221 = vmatprep.subr.mxu0 0.0
        %222 = vmatpush1.xpose.msra.mxu0 %v162
        %223 = vmatprep.subr.mxu0 0.0
        %224 = vmatpush1.xpose.msra.mxu0 %v161
        %225 = vmatprep.subr.mxu0 0.0
        %226 = vmatpush2.xpose.msra.mxu0 %v192
        %227 = vmatprep.subr.mxu0 0.0
        %228 = vmatpush2.xpose.msra.mxu0 %v191
        %229 = vmatprep.subr.mxu0 0.0
        %230 = vmatpush2.xpose.msra.mxu0 %v190
        %231 = vmatprep.subr.mxu0 0.0
        %232 = vmatpush2.xpose.msra.mxu0 %v189
        %233 = vmatprep.subr.mxu0 0.0
        %234 = vmatpush2.xpose.msra.mxu0 %v188
        %235 = vmatprep.subr.mxu0 0.0
        %236 = vmatpush2.xpose.msra.mxu0 %v187
        %237 = vmatprep.subr.mxu0 0.0
        %238 = vmatpush2.xpose.msra.mxu0 %v186
        %239 = vmatprep.subr.mxu0 0.0
        %240 = vmatpush2.xpose.msra.mxu0 %v185
        %241 = vmatprep.subr.mxu0 0.0
        %242 = vmatpush2.xpose.msra.mxu0 %v184
        %243 = vmatprep.subr.mxu0 0.0
        %244 = vmatpush2.xpose.msra.mxu0 %v183
        %245 = vmatprep.subr.mxu0 0.0
        %246 = vmatpush2.xpose.msra.mxu0 %v182
        %247 = vmatprep.subr.mxu0 0.0
        %248 = vmatpush2.xpose.msra.mxu0 %v181
        %249 = vmatprep.subr.mxu0 0.0
        %250 = vmatpush2.xpose.msra.mxu0 %v180
        %251 = vmatprep.subr.mxu0 0.0
        %252 = vmatpush2.xpose.msra.mxu0 %v179
        %253 = vmatprep.subr.mxu0 0.0
        %254 = vmatpush2.xpose.msra.mxu0 %v178
        %255 = vmatprep.subr.mxu0 0.0
        %256 = vmatpush2.xpose.msra.mxu0 %v177
        %257 = vmatprep.mubr.f32.mxu0 0.0
        %258 = vmatmul.mubr.f32.gmra.mxu0 %v145
        %v259 = vpop.f32.mrf.mxu0
        %v260 = vadd.f32 0.0, %v259
        %v261 = vpop.f32.mrf.mxu0
        %v262 = vadd.f32 0.0, %v261
        %263 = vmatprep.mubr.f32.mxu0 0.0
        %264 = vmatmul.mubr.f32.gmra.mxu0 %v146
        %v265 = vpop.f32.mrf.mxu0
        %v266 = vadd.f32 0.0, %v265
        %v267 = vpop.f32.mrf.mxu0
        %v268 = vadd.f32 0.0, %v267
        %269 = vmatprep.mubr.f32.mxu0 0.0
        %270 = vmatmul.mubr.f32.gmra.mxu0 %v147
        %v271 = vpop.f32.mrf.mxu0
        %v272 = vadd.f32 0.0, %v271
        %v273 = vpop.f32.mrf.mxu0
        %v274 = vadd.f32 0.0, %v273
        %275 = vmatprep.mubr.f32.mxu0 0.0
        %276 = vmatmul.mubr.f32.gmra.mxu0 %v148
        %v277 = vpop.f32.mrf.mxu0
        %v278 = vadd.f32 0.0, %v277
        %v279 = vpop.f32.mrf.mxu0
        %v280 = vadd.f32 0.0, %v279
        %281 = vmatprep.mubr.f32.mxu0 0.0
        %282 = vmatmul.mubr.f32.gmra.mxu0 %v149
        %v283 = vpop.f32.mrf.mxu0
        %v284 = vadd.f32 0.0, %v283
        %v285 = vpop.f32.mrf.mxu0
        %v286 = vadd.f32 0.0, %v285
        %287 = vmatprep.mubr.f32.mxu0 0.0
        %288 = vmatmul.mubr.f32.gmra.mxu0 %v150
        %v289 = vpop.f32.mrf.mxu0
        %v290 = vadd.f32 0.0, %v289
        %v291 = vpop.f32.mrf.mxu0
        %v292 = vadd.f32 0.0, %v291
        %293 = vmatprep.mubr.f32.mxu0 0.0
        %294 = vmatmul.mubr.f32.gmra.mxu0 %v151
        %v295 = vpop.f32.mrf.mxu0
        %v296 = vadd.f32 0.0, %v295
        %v297 = vpop.f32.mrf.mxu0
        %v298 = vadd.f32 0.0, %v297
        %299 = vmatprep.mubr.f32.mxu0 0.0
        %300 = vmatmul.mubr.f32.gmra.mxu0 %v152
        %v301 = vpop.f32.mrf.mxu0
        %v302 = vadd.f32 0.0, %v301
        %v303 = vpop.f32.mrf.mxu0
        %v304 = vadd.f32 0.0, %v303
        %305 = vmatprep.mubr.f32.mxu0 0.0
        %306 = vmatmul.mubr.f32.gmra.mxu0 %v153
        %v307 = vpop.f32.mrf.mxu0
        %v308 = vadd.f32 0.0, %v307
        %v309 = vpop.f32.mrf.mxu0
        %v310 = vadd.f32 0.0, %v309
        %311 = vmatprep.mubr.f32.mxu0 0.0
        %312 = vmatmul.mubr.f32.gmra.mxu0 %v154
        %v313 = vpop.f32.mrf.mxu0
        %v314 = vadd.f32 0.0, %v313
        %v315 = vpop.f32.mrf.mxu0
        %v316 = vadd.f32 0.0, %v315
        %317 = vmatprep.mubr.f32.mxu0 0.0
        %318 = vmatmul.mubr.f32.gmra.mxu0 %v155
        %v319 = vpop.f32.mrf.mxu0
        %v320 = vadd.f32 0.0, %v319
        %v321 = vpop.f32.mrf.mxu0
        %v322 = vadd.f32 0.0, %v321
        %323 = vmatprep.mubr.f32.mxu0 0.0
        %324 = vmatmul.mubr.f32.gmra.mxu0 %v156
        %v325 = vpop.f32.mrf.mxu0
        %v326 = vadd.f32 0.0, %v325
        %v327 = vpop.f32.mrf.mxu0
        %v328 = vadd.f32 0.0, %v327
        %329 = vmatprep.mubr.f32.mxu0 0.0
        %330 = vmatmul.mubr.f32.gmra.mxu0 %v157
        %v331 = vpop.f32.mrf.mxu0
        %v332 = vadd.f32 0.0, %v331
        %v333 = vpop.f32.mrf.mxu0
        %v334 = vadd.f32 0.0, %v333
        %335 = vmatprep.mubr.f32.mxu0 0.0
        %336 = vmatmul.mubr.f32.gmra.mxu0 %v158
        %v337 = vpop.f32.mrf.mxu0
        %v338 = vadd.f32 0.0, %v337
        %v339 = vpop.f32.mrf.mxu0
        %v340 = vadd.f32 0.0, %v339
        %341 = vmatprep.mubr.f32.mxu0 0.0
        %342 = vmatmul.mubr.f32.gmra.mxu0 %v159
        %v343 = vpop.f32.mrf.mxu0
        %v344 = vadd.f32 0.0, %v343
        %v345 = vpop.f32.mrf.mxu0
        %v346 = vadd.f32 0.0, %v345
        %347 = vmatprep.mubr.f32.mxu0 0.0
        %348 = vmatmul.mubr.f32.gmra.mxu0 %v160
        %v349 = vpop.f32.mrf.mxu0
        %v350 = vadd.f32 0.0, %v349
        %v351 = vpop.f32.mrf.mxu0
        %v352 = vadd.f32 0.0, %v351
        %353 = vdwg.mxu0
        %v354 = vmul.f32 %v260, 0.5
        %v355 = vmul.f32 %v262, 0.5
        %v356 = vmul.f32 %v266, 0.5
        %v357 = vmul.f32 %v268, 0.5
        %v358 = vmul.f32 %v272, 0.5
        %v359 = vmul.f32 %v274, 0.5
        %v360 = vmul.f32 %v278, 0.5
        %v361 = vmul.f32 %v280, 0.5
        %v362 = vmul.f32 %v284, 0.5
        %v363 = vmul.f32 %v286, 0.5
        %v364 = vmul.f32 %v290, 0.5
        %v365 = vmul.f32 %v292, 0.5
        %v366 = vmul.f32 %v296, 0.5
        %v367 = vmul.f32 %v298, 0.5
        %v368 = vmul.f32 %v302, 0.5
        %v369 = vmul.f32 %v304, 0.5
        %v370 = vmul.f32 %v308, 0.5
        %v371 = vmul.f32 %v310, 0.5
        %v372 = vmul.f32 %v314, 0.5
        %v373 = vmul.f32 %v316, 0.5
        %v374 = vmul.f32 %v320, 0.5
        %v375 = vmul.f32 %v322, 0.5
        %v376 = vmul.f32 %v326, 0.5
        %v377 = vmul.f32 %v328, 0.5
        %v378 = vmul.f32 %v332, 0.5
        %v379 = vmul.f32 %v334, 0.5
        %v380 = vmul.f32 %v338, 0.5
        %v381 = vmul.f32 %v340, 0.5
        %v382 = vmul.f32 %v344, 0.5
        %v383 = vmul.f32 %v346, 0.5
        %v384 = vmul.f32 %v350, 0.5
        %v385 = vmul.f32 %v352, 0.5
        %v386 = vtanh.pop %v354
        %v387 = vtanh.pop %v355
        %v388 = vtanh.pop %v356
        %v389 = vtanh.pop %v357
        %v390 = vtanh.pop %v358
        %v391 = vtanh.pop %v359
        %v392 = vtanh.pop %v360
        %v393 = vtanh.pop %v361
        %v394 = vtanh.pop %v362
        %v395 = vtanh.pop %v363
        %v396 = vtanh.pop %v364
        %v397 = vtanh.pop %v365
        %v398 = vtanh.pop %v366
        %v399 = vtanh.pop %v367
        %v400 = vtanh.pop %v368
        %v401 = vtanh.pop %v369
        %v402 = vtanh.pop %v370
        %v403 = vtanh.pop %v371
        %v404 = vtanh.pop %v372
        %v405 = vtanh.pop %v373
        %v406 = vtanh.pop %v374
        %v407 = vtanh.pop %v375
        %v408 = vtanh.pop %v376
        %v409 = vtanh.pop %v377
        %v410 = vtanh.pop %v378
        %v411 = vtanh.pop %v379
        %v412 = vtanh.pop %v380
        %v413 = vtanh.pop %v381
        %v414 = vtanh.pop %v382
        %v415 = vtanh.pop %v383
        %v416 = vtanh.pop %v384
        %v417 = vtanh.pop %v385
        %v418 = vmul.f32 %v386, 0.5
        %v419 = vmul.f32 %v387, 0.5
        %v420 = vmul.f32 %v388, 0.5
        %v421 = vmul.f32 %v389, 0.5
        %v422 = vmul.f32 %v390, 0.5
        %v423 = vmul.f32 %v391, 0.5
        %v424 = vmul.f32 %v392, 0.5
        %v425 = vmul.f32 %v393, 0.5
        %v426 = vmul.f32 %v394, 0.5
        %v427 = vmul.f32 %v395, 0.5
        %v428 = vmul.f32 %v396, 0.5
        %v429 = vmul.f32 %v397, 0.5
        %v430 = vmul.f32 %v398, 0.5
        %v431 = vmul.f32 %v399, 0.5
        %v432 = vmul.f32 %v400, 0.5
        %v433 = vmul.f32 %v401, 0.5
        %v434 = vmul.f32 %v402, 0.5
        %v435 = vmul.f32 %v403, 0.5
        %v436 = vmul.f32 %v404, 0.5
        %v437 = vmul.f32 %v405, 0.5
        %v438 = vmul.f32 %v406, 0.5
        %v439 = vmul.f32 %v407, 0.5
        %v440 = vmul.f32 %v408, 0.5
        %v441 = vmul.f32 %v409, 0.5
        %v442 = vmul.f32 %v410, 0.5
        %v443 = vmul.f32 %v411, 0.5
        %v444 = vmul.f32 %v412, 0.5
        %v445 = vmul.f32 %v413, 0.5
        %v446 = vmul.f32 %v414, 0.5
        %v447 = vmul.f32 %v415, 0.5
        %v448 = vmul.f32 %v416, 0.5
        %v449 = vmul.f32 %v417, 0.5
        %v450 = vadd.f32 %v418, 0.5
        %v451 = vadd.f32 %v419, 0.5
        %v452 = vadd.f32 %v420, 0.5
        %v453 = vadd.f32 %v421, 0.5
        %v454 = vadd.f32 %v422, 0.5
        %v455 = vadd.f32 %v423, 0.5
        %v456 = vadd.f32 %v424, 0.5
        %v457 = vadd.f32 %v425, 0.5
        %v458 = vadd.f32 %v426, 0.5
        %v459 = vadd.f32 %v427, 0.5
        %v460 = vadd.f32 %v428, 0.5
        %v461 = vadd.f32 %v429, 0.5
        %v462 = vadd.f32 %v430, 0.5
        %v463 = vadd.f32 %v431, 0.5
        %v464 = vadd.f32 %v432, 0.5
        %v465 = vadd.f32 %v433, 0.5
        %v466 = vadd.f32 %v434, 0.5
        %v467 = vadd.f32 %v435, 0.5
        %v468 = vadd.f32 %v436, 0.5
        %v469 = vadd.f32 %v437, 0.5
        %v470 = vadd.f32 %v438, 0.5
        %v471 = vadd.f32 %v439, 0.5
        %v472 = vadd.f32 %v440, 0.5
        %v473 = vadd.f32 %v441, 0.5
        %v474 = vadd.f32 %v442, 0.5
        %v475 = vadd.f32 %v443, 0.5
        %v476 = vadd.f32 %v444, 0.5
        %v477 = vadd.f32 %v445, 0.5
        %v478 = vadd.f32 %v446, 0.5
        %v479 = vadd.f32 %v447, 0.5
        %v480 = vadd.f32 %v448, 0.5
        %v481 = vadd.f32 %v449, 0.5
        %482 = vst [vmem:[%s137] sm:$0xff] %v450
        %483 = vst [vmem:[%s137 + $0x8] sm:$0xff] %v451
        %484 = vst [vmem:[%s137 + $0x10] sm:$0xff] %v452
        %485 = vst [vmem:[%s137 + $0x18] sm:$0xff] %v453
        %486 = vst [vmem:[%s137 + $0x20] sm:$0xff] %v454
        %487 = vst [vmem:[%s137 + $0x28] sm:$0xff] %v455
        %488 = vst [vmem:[%s137 + $0x30] sm:$0xff] %v456
        %489 = vst [vmem:[%s137 + $0x38] sm:$0xff] %v457
        %490 = vst [vmem:[%s137 + $0x40] sm:$0xff] %v458
        %491 = vst [vmem:[%s137 + $0x48] sm:$0xff] %v459
        %492 = vst [vmem:[%s137 + $0x50] sm:$0xff] %v460
        %493 = vst [vmem:[%s137 + $0x58] sm:$0xff] %v461
        %494 = vst [vmem:[%s137 + $0x60] sm:$0xff] %v462
        %495 = vst [vmem:[%s137 + $0x68] sm:$0xff] %v463
        %496 = vst [vmem:[%s137 + $0x70] sm:$0xff] %v464
        %497 = vst [vmem:[%s137 + $0x78] sm:$0xff] %v465
        %498 = vst [vmem:[%s137 + $0x80] sm:$0xff] %v466
        %499 = vst [vmem:[%s137 + $0x88] sm:$0xff] %v467
        %500 = vst [vmem:[%s137 + $0x90] sm:$0xff] %v468
        %501 = vst [vmem:[%s137 + $0x98] sm:$0xff] %v469
        %502 = vst [vmem:[%s137 + $0xa0] sm:$0xff] %v470
        %503 = vst [vmem:[%s137 + $0xa8] sm:$0xff] %v471
        %504 = vst [vmem:[%s137 + $0xb0] sm:$0xff] %v472
        %505 = vst [vmem:[%s137 + $0xb8] sm:$0xff] %v473
        %506 = vst [vmem:[%s137 + $0xc0] sm:$0xff] %v474
        %507 = vst [vmem:[%s137 + $0xc8] sm:$0xff] %v475
        %508 = vst [vmem:[%s137 + $0xd0] sm:$0xff] %v476
        %509 = vst [vmem:[%s137 + $0xd8] sm:$0xff] %v477
        %510 = vst [vmem:[%s137 + $0xe0] sm:$0xff] %v478
        %511 = vst [vmem:[%s137 + $0xe8] sm:$0xff] %v479
        %512 = vst [vmem:[%s137 + $0xf0] sm:$0xff] %v480
        %513 = vst [vmem:[%s137 + $0xf8] sm:$0xff] %v481
        %s514 = sand.u32 %s71, 1
        %s515 = scalar_lea.sflag [#allocation3], %s514
        %s516 = sand.u32 %s71, 1
        %s517 = smul.addr %s516, 256
        %s518 = scalar_lea.vmem [#allocation2], %s517
        // Predicated region
        $region29: #{gat_forward.5} parent=27 // pred_check
          %p519 = pneg %p81
        $region30: #{gat_forward.5} parent=27 // pred_check_branch
          %521 = sbr.rel (%p519) target = $region32
        $region31: #{gat_forward.5} parent=27 // pred_region
          %s522 = smul.u32 16, %s16
          %s524 = ssub.s32 4096, 4096
          %525 = vsyncadd %s515, %s524
          %s526 = smul.addr %s522, 2
          %s527 = smul.addr %s526, 128
          %s528 = scalar_lea.hbm %s2, %s527
          %s529 = sshll.u32 %s518, 4
          %s530 = int_to_ptr.vmem [resolvable:$true] %s529
          %535 = dma.vmem_to_hbm [thread:$0]  %s530, 4096, %s528, %s515, 256, 256, 16
        $region32: #{gat_forward.5} parent=27 // pred_fallthru
          _
      $region28: #{gat_forward.5} parent=5 // pred_fallthru
        _
      %p536 = scmp.le.s32.totalorder 2, %s11
      // Predicated region
      $region33: #{gat_forward.5} parent=5 // pred_check
        %p537 = pneg %p536
      $region34: #{gat_forward.5} parent=5 // pred_check_branch
        %539 = sbr.rel (%p537) target = $region36
      $region35: #{gat_forward.5} parent=5 // pred_region
        %s540 = ssub.s32 %s11, 2
        // Predicated region
        $region37: #{gat_forward.5} parent=35 // pred_check
          %p541 = pneg %p87
        $region38: #{gat_forward.5} parent=35 // pred_check_branch
          %543 = sbr.rel (%p541) target = $region40
        $region39: #{gat_forward.5} parent=35 // pred_region
          %s544 = sand.u32 %s72, 1
          %s545 = scalar_lea.sflag [#allocation3], %s544
          %s546 = sand.u32 %s72, 1
          %s547 = smul.addr %s546, 256
          %s548 = scalar_lea.vmem [#allocation2], %s547
          %549 = dma.done %s545, 4096
        $region40: #{gat_forward.5} parent=35 // pred_fallthru
          _
      $region36: #{gat_forward.5} parent=5 // pred_fallthru
        _
    $region6: #{gat_forward.5} parent=1 // loop_footer
      %s15 = sadd.s32 1, %s11
    $region7: #{gat_forward.5} parent=1 // loop_footer_branch
      %10 = sbr.rel target = $region3
    $region8: #{gat_forward.5} parent=1 // loop_exit
      _
    %550 = vsyncpa [#allocation3], 1
    %s551 = scalar_lea.sflag [#allocation3], 1
    %552 = vsyncpa %s551, 1

// kernel: gat_forward.3
$region0: #{gat_forward.3}
  #allocation0 [shape = 'u32[]', space=smem, size = 0x4, offset = 0x4, fixed_abs, tag = 'smem constant byte address 0x4 - core index']
  #allocation1 [shape = 'u32[144,128]{1,0:T(1,128)}', space=vmem, size = 0x12000, scoped, tag = 'internal scratch']
  %s0 = inlined_call_operand.vmem [shape: f32[256,1], index: 0, kind: input, shape index: {}]
  %s1 = inlined_call_operand.vmem [shape: f32[1,256], index: 1, kind: input, shape index: {}]
  %s2 = inlined_call_operand.vmem [shape: s8[256,256], index: 2, kind: input, shape index: {}]
  %s3 = inlined_call_operand.vmem [shape: f32[256,128], index: 3, kind: input, shape index: {}]
  %s4 = inlined_call_operand.vmem [shape: f32[256,128], index: 4, kind: output, shape index: {}]
  %s5 = sld [smem:[#allocation0]]
  $region49: #{gat_forward.3} parent=0
    _
  %s7 = ssub.s32 1, %s5
  %s8 = scalar_select 0, %s7, %s5
  loop: start=0, step=1, limit=4
  $region2: #{gat_forward.3} parent=0 // loop_pre_header
    _
  $region3: #{gat_forward.3} parent=0 // loop_header
    %s10 = sphi 0, %s14
    %p11 = scmp.ge.s32.totalorder %s10, 4
    %s20 = sphi 0, %s22
    %s23 = sphi 0, %s20
    %s24 = sphi 0, %s23
    %s40 = sphi 0, %s24
    %s44 = sphi 0, %s44
    %s46 = sphi 0, %s44
    %s47 = sphi 0, %s46
    %s61 = sphi 0, %s47
    %s67 = sphi 0, %s69
    %s70 = sphi 0, %s67
    %s71 = sphi 0, %s70
    %s87 = sphi 0, %s71
    %s91 = sphi 0, %s91
    %s93 = sphi 0, %s91
    %s94 = sphi 0, %s93
    %s108 = sphi 0, %s94
    %s114 = sphi 0, %s116
    %s117 = sphi 0, %s114
    %s118 = sphi 0, %s117
    %s134 = sphi 0, %s118
  $region4: #{gat_forward.3} parent=0 // loop_header_branch
    %13 = sbr.rel (%p11) target = $region8
  $region5: #{gat_forward.3} parent=0 // loop_body
    %s15 = ssub.s32 %s10, 1
    %s16 = ssub.s32 %s10, 2
    %s17 = sadd.s32 %s10, 1
    %s18 = ssub.s32 %s10, %s17
    %p19 = scmp.eq.s32.totalorder %s18, 0
    %s21 = sadd.s32 %s20, 1
    %s22 = scalar_select %p19, %s20, %s21
    %p25 = pneg %p19
    %p26 = scmp.eq.s32.totalorder %s10, 1
    %p27 = por %p25, %p26
    %p28 = scmp.ne.s32.totalorder %s20, %s23
    %p29 = scmp.eq.s32.totalorder %s10, 0
    %p30 = por %p28, %p29
    %p31 = scmp.ne.s32.totalorder %s20, %s23
    %p32 = scmp.eq.s32.totalorder %s15, 1
    %p33 = por %p31, %p32
    %p34 = scmp.ne.s32.totalorder %s23, %s24
    %p35 = scmp.eq.s32.totalorder %s15, 0
    %p36 = por %p34, %p35
    %p37 = scmp.ne.s32.totalorder %s23, %s24
    %p38 = scmp.eq.s32.totalorder %s16, 1
    %p39 = por %p37, %p38
    %p41 = scmp.ne.s32.totalorder %s24, %s40
    %p42 = scmp.eq.s32.totalorder %s16, 0
    %p43 = por %p41, %p42
    %s45 = sadd.s32 %s44, 1
    %p48 = scmp.eq.s32.totalorder %s10, 1
    %p49 = scmp.ne.s32.totalorder %s44, %s46
    %p50 = scmp.eq.s32.totalorder %s10, 0
    %p51 = por %p49, %p50
    %p52 = scmp.ne.s32.totalorder %s44, %s46
    %p53 = scmp.eq.s32.totalorder %s15, 1
    %p54 = por %p52, %p53
    %p55 = scmp.ne.s32.totalorder %s46, %s47
    %p56 = scmp.eq.s32.totalorder %s15, 0
    %p57 = por %p55, %p56
    %p58 = scmp.ne.s32.totalorder %s46, %s47
    %p59 = scmp.eq.s32.totalorder %s16, 1
    %p60 = por %p58, %p59
    %p62 = scmp.ne.s32.totalorder %s47, %s61
    %p63 = scmp.eq.s32.totalorder %s16, 0
    %p64 = por %p62, %p63
    %s65 = ssub.s32 %s10, %s17
    %p66 = scmp.eq.s32.totalorder %s65, 0
    %s68 = sadd.s32 %s67, 1
    %s69 = scalar_select %p66, %s67, %s68
    %p72 = pneg %p66
    %p73 = scmp.eq.s32.totalorder %s10, 1
    %p74 = por %p72, %p73
    %p75 = scmp.ne.s32.totalorder %s67, %s70
    %p76 = scmp.eq.s32.totalorder %s10, 0
    %p77 = por %p75, %p76
    %p78 = scmp.ne.s32.totalorder %s67, %s70
    %p79 = scmp.eq.s32.totalorder %s15, 1
    %p80 = por %p78, %p79
    %p81 = scmp.ne.s32.totalorder %s70, %s71
    %p82 = scmp.eq.s32.totalorder %s15, 0
    %p83 = por %p81, %p82
    %p84 = scmp.ne.s32.totalorder %s70, %s71
    %p85 = scmp.eq.s32.totalorder %s16, 1
    %p86 = por %p84, %p85
    %p88 = scmp.ne.s32.totalorder %s71, %s87
    %p89 = scmp.eq.s32.totalorder %s16, 0
    %p90 = por %p88, %p89
    %s92 = sadd.s32 %s91, 1
    %p95 = scmp.eq.s32.totalorder %s10, 1
    %p96 = scmp.ne.s32.totalorder %s91, %s93
    %p97 = scmp.eq.s32.totalorder %s10, 0
    %p98 = por %p96, %p97
    %p99 = scmp.ne.s32.totalorder %s91, %s93
    %p100 = scmp.eq.s32.totalorder %s15, 1
    %p101 = por %p99, %p100
    %p102 = scmp.ne.s32.totalorder %s93, %s94
    %p103 = scmp.eq.s32.totalorder %s15, 0
    %p104 = por %p102, %p103
    %p105 = scmp.ne.s32.totalorder %s93, %s94
    %p106 = scmp.eq.s32.totalorder %s16, 1
    %p107 = por %p105, %p106
    %p109 = scmp.ne.s32.totalorder %s94, %s108
    %p110 = scmp.eq.s32.totalorder %s16, 0
    %p111 = por %p109, %p110
    %s112 = ssub.s32 %s10, %s17
    %p113 = scmp.eq.s32.totalorder %s112, 0
    %s115 = sadd.s32 %s114, 1
    %s116 = scalar_select %p113, %s114, %s115
    %p119 = pneg %p113
    %p120 = scmp.eq.s32.totalorder %s10, 1
    %p121 = por %p119, %p120
    %p122 = scmp.ne.s32.totalorder %s114, %s117
    %p123 = scmp.eq.s32.totalorder %s10, 0
    %p124 = por %p122, %p123
    %p125 = scmp.ne.s32.totalorder %s114, %s117
    %p126 = scmp.eq.s32.totalorder %s15, 1
    %p127 = por %p125, %p126
    %p128 = scmp.ne.s32.totalorder %s117, %s118
    %p129 = scmp.eq.s32.totalorder %s15, 0
    %p130 = por %p128, %p129
    %p131 = scmp.ne.s32.totalorder %s117, %s118
    %p132 = scmp.eq.s32.totalorder %s16, 1
    %p133 = por %p131, %p132
    %p135 = scmp.ne.s32.totalorder %s118, %s134
    %p136 = scmp.eq.s32.totalorder %s16, 0
    %p137 = por %p135, %p136
    %p138 = scmp.le.s32.totalorder 1, %s10
    %p139 = scmp.lt.s32.totalorder %s10, 3
    %p140 = pnand %p138, %p139
    %p141 = pneg %p140
    // Predicated region
    $region9: #{gat_forward.3} parent=5 // pred_check
      _
    $region10: #{gat_forward.3} parent=5 // pred_check_branch
      %143 = sbr.rel (%p140) target = $region12
    $region11: #{gat_forward.3} parent=5 // pred_region
      %s144 = ssub.s32 %s10, 1
      // Predicated region
      $region13: #{gat_forward.3} parent=11 // pred_check
        %p145 = pneg %p57
      $region14: #{gat_forward.3} parent=11 // pred_check_branch
        %147 = sbr.rel (%p145) target = $region16
      $region15: #{gat_forward.3} parent=11 // pred_region
        _
      $region16: #{gat_forward.3} parent=11 // pred_fallthru
        _
      // Predicated region
      $region17: #{gat_forward.3} parent=11 // pred_check
        %p148 = pneg %p104
      $region18: #{gat_forward.3} parent=11 // pred_check_branch
        %150 = sbr.rel (%p148) target = $region20
      $region19: #{gat_forward.3} parent=11 // pred_region
        _
      $region20: #{gat_forward.3} parent=11 // pred_fallthru
        _
    $region12: #{gat_forward.3} parent=5 // pred_fallthru
      _
    %p151 = scmp.lt.s32.totalorder %s10, 2
    // Predicated region
    $region21: #{gat_forward.3} parent=5 // pred_check
      %p152 = pneg %p151
    $region22: #{gat_forward.3} parent=5 // pred_check_branch
      %154 = sbr.rel (%p152) target = $region24
    $region23: #{gat_forward.3} parent=5 // pred_region
      // Predicated region
      $region25: #{gat_forward.3} parent=23 // pred_check
        %p155 = pneg %p30
      $region26: #{gat_forward.3} parent=23 // pred_check_branch
        %157 = sbr.rel (%p155) target = $region28
      $region27: #{gat_forward.3} parent=23 // pred_region
        %s158 = smul.u32 16, %s10
        %p159 = scmp.lt.s32.totalorder %s158, 31
        %s160 = scalar_select %p159, %s158, 31
        %s161 = smul.addr %s160, 8
        %s162 = scalar_lea.vmem %s0, %s161
        %s163 = smul.u32 16, %s10
      $region28: #{gat_forward.3} parent=23 // pred_fallthru
        _
      // Predicated region
      $region29: #{gat_forward.3} parent=23 // pred_check
        %p164 = pneg %p77
      $region30: #{gat_forward.3} parent=23 // pred_check_branch
        %166 = sbr.rel (%p164) target = $region32
      $region31: #{gat_forward.3} parent=23 // pred_region
        %s167 = smul.u32 4, %s10
        %p168 = scmp.lt.s32.totalorder %s167, 7
        %s169 = scalar_select %p168, %s167, 7
        %s170 = smul.addr %s169, 2
        %s171 = smul.addr %s170, 8
        %s172 = scalar_lea.vmem %s2, %s171
        %s173 = smul.u32 4, %s10
      $region32: #{gat_forward.3} parent=23 // pred_fallthru
        _
    $region24: #{gat_forward.3} parent=5 // pred_fallthru
      _
    %p174 = scmp.le.s32.totalorder 1, %s10
    %p175 = scmp.lt.s32.totalorder %s10, 3
    %p176 = pnand %p174, %p175
    %p177 = pneg %p176
    // Predicated region
    $region33: #{gat_forward.3} parent=5 // pred_check
      _
    $region34: #{gat_forward.3} parent=5 // pred_check_branch
      %179 = sbr.rel (%p176) target = $region36
    $region35: #{gat_forward.3} parent=5 // pred_region
      %s180 = ssub.s32 %s10, 1
      %s181 = smul.u32 16, %s15
      %p182 = scmp.lt.s32.totalorder %s181, 31
      %s183 = scalar_select %p182, %s181, 31
      %s184 = smul.addr %s183, 8
      %s185 = scalar_lea.vmem %s0, %s184
      %p186 = pneg %p36
      %p187 = pneg %p33
      %p188 = pneg %p57
      %p189 = pneg %p54
      %s190 = smul.u32 4, %s15
      %p191 = scmp.lt.s32.totalorder %s190, 7
      %s192 = scalar_select %p191, %s190, 7
      %s193 = smul.addr %s192, 2
      %s194 = smul.addr %s193, 8
      %s195 = scalar_lea.vmem %s2, %s194
      %p196 = pneg %p83
      %p197 = pneg %p80
      %p198 = pneg %p104
      %p199 = pneg %p101
      %p200 = pneg %p130
      %p201 = pneg %p127
      %s202 = smul.u32 16, %s15
      %p203 = scmp.lt.s32.totalorder %s202, 31
      %s204 = scalar_select %p203, %s202, 31
      %s205 = smul.addr %s204, 8
      %s206 = scalar_lea.vmem %s4, %s205
      %s207 = smul.u32 16, %s15
      %p208 = scmp.lt.s32.totalorder %s207, 31
      %s209 = scalar_select %p208, %s207, 31
      %s210 = smul.addr %s209, 8
      %s211 = scalar_lea.vmem %s0, %s210
      %s212 = smul.u32 16, %s15
      %s213 = smul.u32 4, %s15
      %p214 = scmp.lt.s32.totalorder %s213, 7
      %s215 = scalar_select %p214, %s213, 7
      %s216 = smul.addr %s215, 2
      %s217 = smul.addr %s216, 8
      %s218 = scalar_lea.vmem %s2, %s217
      %s219 = smul.u32 4, %s15
      %s220 = smul.u32 16, %s15
      %p221 = scmp.lt.s32.totalorder %s220, 31
      %s222 = scalar_select %p221, %s220, 31
      %s223 = smul.addr %s222, 8
      %s224 = scalar_lea.vmem %s4, %s223
      %s225 = smul.u32 16, %s15
      %v226 = vld [vmem:[%s211] sm:$0xff]
      %v227 = vld [vmem:[%s211 + $0x8] sm:$0xff]
      %v228 = vld [vmem:[%s211 + $0x10] sm:$0xff]
      %v229 = vld [vmem:[%s211 + $0x18] sm:$0xff]
      %v230 = vld [vmem:[%s211 + $0x20] sm:$0xff]
      %v231 = vld [vmem:[%s211 + $0x28] sm:$0xff]
      %v232 = vld [vmem:[%s211 + $0x30] sm:$0xff]
      %v233 = vld [vmem:[%s211 + $0x38] sm:$0xff]
      %v234 = vld [vmem:[%s211 + $0x40] sm:$0xff]
      %v235 = vld [vmem:[%s211 + $0x48] sm:$0xff]
      %v236 = vld [vmem:[%s211 + $0x50] sm:$0xff]
      %v237 = vld [vmem:[%s211 + $0x58] sm:$0xff]
      %v238 = vld [vmem:[%s211 + $0x60] sm:$0xff]
      %v239 = vld [vmem:[%s211 + $0x68] sm:$0xff]
      %v240 = vld [vmem:[%s211 + $0x70] sm:$0xff]
      %v241 = vld [vmem:[%s211 + $0x78] sm:$0xff]
      %v242 = vld [vmem:[%s1] sm:$0x3]
      %244 = vset.pattern.permute.xlu0 0
      %245 = vperm.xlu0 %244, %v226
      %v246 = vpop.permute.xlu0 %245
      %249 = vset.pattern.permute.xlu0 0
      %250 = vperm.xlu0 %249, %v227
      %v251 = vpop.permute.xlu0 %250
      %254 = vset.pattern.permute.xlu0 0
      %255 = vperm.xlu0 %254, %v228
      %v256 = vpop.permute.xlu0 %255
      %259 = vset.pattern.permute.xlu0 0
      %260 = vperm.xlu0 %259, %v229
      %v261 = vpop.permute.xlu0 %260
      %264 = vset.pattern.permute.xlu0 0
      %265 = vperm.xlu0 %264, %v230
      %v266 = vpop.permute.xlu0 %265
      %269 = vset.pattern.permute.xlu0 0
      %270 = vperm.xlu0 %269, %v231
      %v271 = vpop.permute.xlu0 %270
      %274 = vset.pattern.permute.xlu0 0
      %275 = vperm.xlu0 %274, %v232
      %v276 = vpop.permute.xlu0 %275
      %279 = vset.pattern.permute.xlu0 0
      %280 = vperm.xlu0 %279, %v233
      %v281 = vpop.permute.xlu0 %280
      %284 = vset.pattern.permute.xlu0 0
      %285 = vperm.xlu0 %284, %v234
      %v286 = vpop.permute.xlu0 %285
      %289 = vset.pattern.permute.xlu0 0
      %290 = vperm.xlu0 %289, %v235
      %v291 = vpop.permute.xlu0 %290
      %294 = vset.pattern.permute.xlu0 0
      %295 = vperm.xlu0 %294, %v236
      %v296 = vpop.permute.xlu0 %295
      %299 = vset.pattern.permute.xlu0 0
      %300 = vperm.xlu0 %299, %v237
      %v301 = vpop.permute.xlu0 %300
      %304 = vset.pattern.permute.xlu0 0
      %305 = vperm.xlu0 %304, %v238
      %v306 = vpop.permute.xlu0 %305
      %309 = vset.pattern.permute.xlu0 0
      %310 = vperm.xlu0 %309, %v239
      %v311 = vpop.permute.xlu0 %310
      %314 = vset.pattern.permute.xlu0 0
      %315 = vperm.xlu0 %314, %v240
      %v316 = vpop.permute.xlu0 %315
      %319 = vset.pattern.permute.xlu0 0
      %320 = vperm.xlu0 %319, %v241
      %v321 = vpop.permute.xlu0 %320
      %v324 = vlaneseq
      %v325 = vshrl.u32 %v324, 7
      %v326 = vsub.s32 0, %v325
      %v327 = vrot.slane %v242, %v326
      %v328 = vlaneseq
      %v329 = vshrl.u32 %v328, 7
      %v330 = vsub.s32 1, %v329
      %v331 = vrot.slane %v242, %v330
      %v334 = vadd.f32 %v246, %v327
      %v335 = vadd.f32 %v246, %v331
      %v336 = vadd.f32 %v251, %v327
      %v337 = vadd.f32 %v251, %v331
      %v338 = vadd.f32 %v256, %v327
      %v339 = vadd.f32 %v256, %v331
      %v340 = vadd.f32 %v261, %v327
      %v341 = vadd.f32 %v261, %v331
      %v342 = vadd.f32 %v266, %v327
      %v343 = vadd.f32 %v266, %v331
      %v344 = vadd.f32 %v271, %v327
      %v345 = vadd.f32 %v271, %v331
      %v346 = vadd.f32 %v276, %v327
      %v347 = vadd.f32 %v276, %v331
      %v348 = vadd.f32 %v281, %v327
      %v349 = vadd.f32 %v281, %v331
      %v350 = vadd.f32 %v286, %v327
      %v351 = vadd.f32 %v286, %v331
      %v352 = vadd.f32 %v291, %v327
      %v353 = vadd.f32 %v291, %v331
      %v354 = vadd.f32 %v296, %v327
      %v355 = vadd.f32 %v296, %v331
      %v356 = vadd.f32 %v301, %v327
      %v357 = vadd.f32 %v301, %v331
      %v358 = vadd.f32 %v306, %v327
      %v359 = vadd.f32 %v306, %v331
      %v360 = vadd.f32 %v311, %v327
      %v361 = vadd.f32 %v311, %v331
      %v362 = vadd.f32 %v316, %v327
      %v363 = vadd.f32 %v316, %v331
      %v364 = vadd.f32 %v321, %v327
      %v365 = vadd.f32 %v321, %v331
      %vm366 = vcmp.gt.f32.partialorder %v334, 0.0
      %vm367 = vcmp.gt.f32.partialorder %v335, 0.0
      %vm368 = vcmp.gt.f32.partialorder %v336, 0.0
      %vm369 = vcmp.gt.f32.partialorder %v337, 0.0
      %vm370 = vcmp.gt.f32.partialorder %v338, 0.0
      %vm371 = vcmp.gt.f32.partialorder %v339, 0.0
      %vm372 = vcmp.gt.f32.partialorder %v340, 0.0
      %vm373 = vcmp.gt.f32.partialorder %v341, 0.0
      %vm374 = vcmp.gt.f32.partialorder %v342, 0.0
      %vm375 = vcmp.gt.f32.partialorder %v343, 0.0
      %vm376 = vcmp.gt.f32.partialorder %v344, 0.0
      %vm377 = vcmp.gt.f32.partialorder %v345, 0.0
      %vm378 = vcmp.gt.f32.partialorder %v346, 0.0
      %vm379 = vcmp.gt.f32.partialorder %v347, 0.0
      %vm380 = vcmp.gt.f32.partialorder %v348, 0.0
      %vm381 = vcmp.gt.f32.partialorder %v349, 0.0
      %vm382 = vcmp.gt.f32.partialorder %v350, 0.0
      %vm383 = vcmp.gt.f32.partialorder %v351, 0.0
      %vm384 = vcmp.gt.f32.partialorder %v352, 0.0
      %vm385 = vcmp.gt.f32.partialorder %v353, 0.0
      %vm386 = vcmp.gt.f32.partialorder %v354, 0.0
      %vm387 = vcmp.gt.f32.partialorder %v355, 0.0
      %vm388 = vcmp.gt.f32.partialorder %v356, 0.0
      %vm389 = vcmp.gt.f32.partialorder %v357, 0.0
      %vm390 = vcmp.gt.f32.partialorder %v358, 0.0
      %vm391 = vcmp.gt.f32.partialorder %v359, 0.0
      %vm392 = vcmp.gt.f32.partialorder %v360, 0.0
      %vm393 = vcmp.gt.f32.partialorder %v361, 0.0
      %vm394 = vcmp.gt.f32.partialorder %v362, 0.0
      %vm395 = vcmp.gt.f32.partialorder %v363, 0.0
      %vm396 = vcmp.gt.f32.partialorder %v364, 0.0
      %vm397 = vcmp.gt.f32.partialorder %v365, 0.0
      %v398 = vmul.f32 %v334, 0.2
      %v399 = vmul.f32 %v335, 0.2
      %v400 = vmul.f32 %v336, 0.2
      %v401 = vmul.f32 %v337, 0.2
      %v402 = vmul.f32 %v338, 0.2
      %v403 = vmul.f32 %v339, 0.2
      %v404 = vmul.f32 %v340, 0.2
      %v405 = vmul.f32 %v341, 0.2
      %v406 = vmul.f32 %v342, 0.2
      %v407 = vmul.f32 %v343, 0.2
      %v408 = vmul.f32 %v344, 0.2
      %v409 = vmul.f32 %v345, 0.2
      %v410 = vmul.f32 %v346, 0.2
      %v411 = vmul.f32 %v347, 0.2
      %v412 = vmul.f32 %v348, 0.2
      %v413 = vmul.f32 %v349, 0.2
      %v414 = vmul.f32 %v350, 0.2
      %v415 = vmul.f32 %v351, 0.2
      %v416 = vmul.f32 %v352, 0.2
      %v417 = vmul.f32 %v353, 0.2
      %v418 = vmul.f32 %v354, 0.2
      %v419 = vmul.f32 %v355, 0.2
      %v420 = vmul.f32 %v356, 0.2
      %v421 = vmul.f32 %v357, 0.2
      %v422 = vmul.f32 %v358, 0.2
      %v423 = vmul.f32 %v359, 0.2
      %v424 = vmul.f32 %v360, 0.2
      %v425 = vmul.f32 %v361, 0.2
      %v426 = vmul.f32 %v362, 0.2
      %v427 = vmul.f32 %v363, 0.2
      %v428 = vmul.f32 %v364, 0.2
      %v429 = vmul.f32 %v365, 0.2
      %v430 = vsel %vm366, %v334, %v398
      %v431 = vsel %vm367, %v335, %v399
      %v432 = vsel %vm368, %v336, %v400
      %v433 = vsel %vm369, %v337, %v401
      %v434 = vsel %vm370, %v338, %v402
      %v435 = vsel %vm371, %v339, %v403
      %v436 = vsel %vm372, %v340, %v404
      %v437 = vsel %vm373, %v341, %v405
      %v438 = vsel %vm374, %v342, %v406
      %v439 = vsel %vm375, %v343, %v407
      %v440 = vsel %vm376, %v344, %v408
      %v441 = vsel %vm377, %v345, %v409
      %v442 = vsel %vm378, %v346, %v410
      %v443 = vsel %vm379, %v347, %v411
      %v444 = vsel %vm380, %v348, %v412
      %v445 = vsel %vm381, %v349, %v413
      %v446 = vsel %vm382, %v350, %v414
      %v447 = vsel %vm383, %v351, %v415
      %v448 = vsel %vm384, %v352, %v416
      %v449 = vsel %vm385, %v353, %v417
      %v450 = vsel %vm386, %v354, %v418
      %v451 = vsel %vm387, %v355, %v419
      %v452 = vsel %vm388, %v356, %v420
      %v453 = vsel %vm389, %v357, %v421
      %v454 = vsel %vm390, %v358, %v422
      %v455 = vsel %vm391, %v359, %v423
      %v456 = vsel %vm392, %v360, %v424
      %v457 = vsel %vm393, %v361, %v425
      %v458 = vsel %vm394, %v362, %v426
      %v459 = vsel %vm395, %v363, %v427
      %v460 = vsel %vm396, %v364, %v428
      %v461 = vsel %vm397, %v365, %v429
      %v462 = vld [vmem:[%s218] sm:$0xff]
      %v463 = vld [vmem:[%s218 + $0x8] sm:$0xff]
      %v464 = vld [vmem:[%s218 + $0x10] sm:$0xff]
      %v465 = vld [vmem:[%s218 + $0x18] sm:$0xff]
      %v466 = vld [vmem:[%s218 + $0x20] sm:$0xff]
      %v467 = vld [vmem:[%s218 + $0x28] sm:$0xff]
      %v468 = vld [vmem:[%s218 + $0x30] sm:$0xff]
      %v469 = vld [vmem:[%s218 + $0x38] sm:$0xff]
      %v470 = vunpack.c.0.s8 %v462
      %v471 = vunpack.c.0.s8 %v463
      %v472 = vunpack.c.1.s8 %v462
      %v473 = vunpack.c.1.s8 %v463
      %v474 = vunpack.c.2.s8 %v462
      %v475 = vunpack.c.2.s8 %v463
      %v476 = vunpack.c.3.s8 %v462
      %v477 = vunpack.c.3.s8 %v463
      %v478 = vunpack.c.0.s8 %v464
      %v479 = vunpack.c.0.s8 %v465
      %v480 = vunpack.c.1.s8 %v464
      %v481 = vunpack.c.1.s8 %v465
      %v482 = vunpack.c.2.s8 %v464
      %v483 = vunpack.c.2.s8 %v465
      %v484 = vunpack.c.3.s8 %v464
      %v485 = vunpack.c.3.s8 %v465
      %v486 = vunpack.c.0.s8 %v466
      %v487 = vunpack.c.0.s8 %v467
      %v488 = vunpack.c.1.s8 %v466
      %v489 = vunpack.c.1.s8 %v467
      %v490 = vunpack.c.2.s8 %v466
      %v491 = vunpack.c.2.s8 %v467
      %v492 = vunpack.c.3.s8 %v466
      %v493 = vunpack.c.3.s8 %v467
      %v494 = vunpack.c.0.s8 %v468
      %v495 = vunpack.c.0.s8 %v469
      %v496 = vunpack.c.1.s8 %v468
      %v497 = vunpack.c.1.s8 %v469
      %v498 = vunpack.c.2.s8 %v468
      %v499 = vunpack.c.2.s8 %v469
      %v500 = vunpack.c.3.s8 %v468
      %v501 = vunpack.c.3.s8 %v469
      %v502 = vcvt.s32.f32 %v470
      %v503 = vcvt.s32.f32 %v471
      %v504 = vcvt.s32.f32 %v472
      %v505 = vcvt.s32.f32 %v473
      %v506 = vcvt.s32.f32 %v474
      %v507 = vcvt.s32.f32 %v475
      %v508 = vcvt.s32.f32 %v476
      %v509 = vcvt.s32.f32 %v477
      %v510 = vcvt.s32.f32 %v478
      %v511 = vcvt.s32.f32 %v479
      %v512 = vcvt.s32.f32 %v480
      %v513 = vcvt.s32.f32 %v481
      %v514 = vcvt.s32.f32 %v482
      %v515 = vcvt.s32.f32 %v483
      %v516 = vcvt.s32.f32 %v484
      %v517 = vcvt.s32.f32 %v485
      %v518 = vcvt.s32.f32 %v486
      %v519 = vcvt.s32.f32 %v487
      %v520 = vcvt.s32.f32 %v488
      %v521 = vcvt.s32.f32 %v489
      %v522 = vcvt.s32.f32 %v490
      %v523 = vcvt.s32.f32 %v491
      %v524 = vcvt.s32.f32 %v492
      %v525 = vcvt.s32.f32 %v493
      %v526 = vcvt.s32.f32 %v494
      %v527 = vcvt.s32.f32 %v495
      %v528 = vcvt.s32.f32 %v496
      %v529 = vcvt.s32.f32 %v497
      %v530 = vcvt.s32.f32 %v498
      %v531 = vcvt.s32.f32 %v499
      %v532 = vcvt.s32.f32 %v500
      %v533 = vcvt.s32.f32 %v501
      %vm534 = vcmp.gt.f32.partialorder %v502, 0.0
      %vm535 = vcmp.gt.f32.partialorder %v503, 0.0
      %vm536 = vcmp.gt.f32.partialorder %v504, 0.0
      %vm537 = vcmp.gt.f32.partialorder %v505, 0.0
      %vm538 = vcmp.gt.f32.partialorder %v506, 0.0
      %vm539 = vcmp.gt.f32.partialorder %v507, 0.0
      %vm540 = vcmp.gt.f32.partialorder %v508, 0.0
      %vm541 = vcmp.gt.f32.partialorder %v509, 0.0
      %vm542 = vcmp.gt.f32.partialorder %v510, 0.0
      %vm543 = vcmp.gt.f32.partialorder %v511, 0.0
      %vm544 = vcmp.gt.f32.partialorder %v512, 0.0
      %vm545 = vcmp.gt.f32.partialorder %v513, 0.0
      %vm546 = vcmp.gt.f32.partialorder %v514, 0.0
      %vm547 = vcmp.gt.f32.partialorder %v515, 0.0
      %vm548 = vcmp.gt.f32.partialorder %v516, 0.0
      %vm549 = vcmp.gt.f32.partialorder %v517, 0.0
      %vm550 = vcmp.gt.f32.partialorder %v518, 0.0
      %vm551 = vcmp.gt.f32.partialorder %v519, 0.0
      %vm552 = vcmp.gt.f32.partialorder %v520, 0.0
      %vm553 = vcmp.gt.f32.partialorder %v521, 0.0
      %vm554 = vcmp.gt.f32.partialorder %v522, 0.0
      %vm555 = vcmp.gt.f32.partialorder %v523, 0.0
      %vm556 = vcmp.gt.f32.partialorder %v524, 0.0
      %vm557 = vcmp.gt.f32.partialorder %v525, 0.0
      %vm558 = vcmp.gt.f32.partialorder %v526, 0.0
      %vm559 = vcmp.gt.f32.partialorder %v527, 0.0
      %vm560 = vcmp.gt.f32.partialorder %v528, 0.0
      %vm561 = vcmp.gt.f32.partialorder %v529, 0.0
      %vm562 = vcmp.gt.f32.partialorder %v530, 0.0
      %vm563 = vcmp.gt.f32.partialorder %v531, 0.0
      %vm564 = vcmp.gt.f32.partialorder %v532, 0.0
      %vm565 = vcmp.gt.f32.partialorder %v533, 0.0
      %v566 = vsel %vm534, %v430, -9e+15
      %v567 = vsel %vm535, %v431, -9e+15
      %v568 = vsel %vm536, %v432, -9e+15
      %v569 = vsel %vm537, %v433, -9e+15
      %v570 = vsel %vm538, %v434, -9e+15
      %v571 = vsel %vm539, %v435, -9e+15
      %v572 = vsel %vm540, %v436, -9e+15
      %v573 = vsel %vm541, %v437, -9e+15
      %v574 = vsel %vm542, %v438, -9e+15
      %v575 = vsel %vm543, %v439, -9e+15
      %v576 = vsel %vm544, %v440, -9e+15
      %v577 = vsel %vm545, %v441, -9e+15
      %v578 = vsel %vm546, %v442, -9e+15
      %v579 = vsel %vm547, %v443, -9e+15
      %v580 = vsel %vm548, %v444, -9e+15
      %v581 = vsel %vm549, %v445, -9e+15
      %v582 = vsel %vm550, %v446, -9e+15
      %v583 = vsel %vm551, %v447, -9e+15
      %v584 = vsel %vm552, %v448, -9e+15
      %v585 = vsel %vm553, %v449, -9e+15
      %v586 = vsel %vm554, %v450, -9e+15
      %v587 = vsel %vm555, %v451, -9e+15
      %v588 = vsel %vm556, %v452, -9e+15
      %v589 = vsel %vm557, %v453, -9e+15
      %v590 = vsel %vm558, %v454, -9e+15
      %v591 = vsel %vm559, %v455, -9e+15
      %v592 = vsel %vm560, %v456, -9e+15
      %v593 = vsel %vm561, %v457, -9e+15
      %v594 = vsel %vm562, %v458, -9e+15
      %v595 = vsel %vm563, %v459, -9e+15
      %v596 = vsel %vm564, %v460, -9e+15
      %v597 = vsel %vm565, %v461, -9e+15
      %v598 = vmax.f32 %v566, %v567
      %599 = vmax.xlane.f32.xlu0 %v598
      %v600 = vpop.xlane.xlu0 %599
      %v601 = vmax.f32 %v568, %v569
      %602 = vmax.xlane.f32.xlu0 %v601
      %v603 = vpop.xlane.xlu0 %602
      %v604 = vmax.f32 %v570, %v571
      %605 = vmax.xlane.f32.xlu0 %v604
      %v606 = vpop.xlane.xlu0 %605
      %v607 = vmax.f32 %v572, %v573
      %608 = vmax.xlane.f32.xlu0 %v607
      %v609 = vpop.xlane.xlu0 %608
      %v610 = vmax.f32 %v574, %v575
      %611 = vmax.xlane.f32.xlu0 %v610
      %v612 = vpop.xlane.xlu0 %611
      %v613 = vmax.f32 %v576, %v577
      %614 = vmax.xlane.f32.xlu0 %v613
      %v615 = vpop.xlane.xlu0 %614
      %v616 = vmax.f32 %v578, %v579
      %617 = vmax.xlane.f32.xlu0 %v616
      %v618 = vpop.xlane.xlu0 %617
      %v619 = vmax.f32 %v580, %v581
      %620 = vmax.xlane.f32.xlu0 %v619
      %v621 = vpop.xlane.xlu0 %620
      %v622 = vmax.f32 %v582, %v583
      %623 = vmax.xlane.f32.xlu0 %v622
      %v624 = vpop.xlane.xlu0 %623
      %v625 = vmax.f32 %v584, %v585
      %626 = vmax.xlane.f32.xlu0 %v625
      %v627 = vpop.xlane.xlu0 %626
      %v628 = vmax.f32 %v586, %v587
      %629 = vmax.xlane.f32.xlu0 %v628
      %v630 = vpop.xlane.xlu0 %629
      %v631 = vmax.f32 %v588, %v589
      %632 = vmax.xlane.f32.xlu0 %v631
      %v633 = vpop.xlane.xlu0 %632
      %v634 = vmax.f32 %v590, %v591
      %635 = vmax.xlane.f32.xlu0 %v634
      %v636 = vpop.xlane.xlu0 %635
      %v637 = vmax.f32 %v592, %v593
      %638 = vmax.xlane.f32.xlu0 %v637
      %v639 = vpop.xlane.xlu0 %638
      %v640 = vmax.f32 %v594, %v595
      %641 = vmax.xlane.f32.xlu0 %v640
      %v642 = vpop.xlane.xlu0 %641
      %v643 = vmax.f32 %v596, %v597
      %644 = vmax.xlane.f32.xlu0 %v643
      %v645 = vpop.xlane.xlu0 %644
      %v646 = vsub.f32 %v566, %v600
      %v647 = vsub.f32 %v567, %v600
      %v648 = vsub.f32 %v568, %v603
      %v649 = vsub.f32 %v569, %v603
      %v650 = vsub.f32 %v570, %v606
      %v651 = vsub.f32 %v571, %v606
      %v652 = vsub.f32 %v572, %v609
      %v653 = vsub.f32 %v573, %v609
      %v654 = vsub.f32 %v574, %v612
      %v655 = vsub.f32 %v575, %v612
      %v656 = vsub.f32 %v576, %v615
      %v657 = vsub.f32 %v577, %v615
      %v658 = vsub.f32 %v578, %v618
      %v659 = vsub.f32 %v579, %v618
      %v660 = vsub.f32 %v580, %v621
      %v661 = vsub.f32 %v581, %v621
      %v662 = vsub.f32 %v582, %v624
      %v663 = vsub.f32 %v583, %v624
      %v664 = vsub.f32 %v584, %v627
      %v665 = vsub.f32 %v585, %v627
      %v666 = vsub.f32 %v586, %v630
      %v667 = vsub.f32 %v587, %v630
      %v668 = vsub.f32 %v588, %v633
      %v669 = vsub.f32 %v589, %v633
      %v670 = vsub.f32 %v590, %v636
      %v671 = vsub.f32 %v591, %v636
      %v672 = vsub.f32 %v592, %v639
      %v673 = vsub.f32 %v593, %v639
      %v674 = vsub.f32 %v594, %v642
      %v675 = vsub.f32 %v595, %v642
      %v676 = vsub.f32 %v596, %v645
      %v677 = vsub.f32 %v597, %v645
      %v678 = vmul.f32 %v646, 1.442695
      %v679 = vpow.pop %v678
      %v680 = vmul.f32 %v647, 1.442695
      %v681 = vpow.pop %v680
      %v682 = vmul.f32 %v648, 1.442695
      %v683 = vpow.pop %v682
      %v684 = vmul.f32 %v649, 1.442695
      %v685 = vpow.pop %v684
      %v686 = vmul.f32 %v650, 1.442695
      %v687 = vpow.pop %v686
      %v688 = vmul.f32 %v651, 1.442695
      %v689 = vpow.pop %v688
      %v690 = vmul.f32 %v652, 1.442695
      %v691 = vpow.pop %v690
      %v692 = vmul.f32 %v653, 1.442695
      %v693 = vpow.pop %v692
      %v694 = vmul.f32 %v654, 1.442695
      %v695 = vpow.pop %v694
      %v696 = vmul.f32 %v655, 1.442695
      %v697 = vpow.pop %v696
      %v698 = vmul.f32 %v656, 1.442695
      %v699 = vpow.pop %v698
      %v700 = vmul.f32 %v657, 1.442695
      %v701 = vpow.pop %v700
      %v702 = vmul.f32 %v658, 1.442695
      %v703 = vpow.pop %v702
      %v704 = vmul.f32 %v659, 1.442695
      %v705 = vpow.pop %v704
      %v706 = vmul.f32 %v660, 1.442695
      %v707 = vpow.pop %v706
      %v708 = vmul.f32 %v661, 1.442695
      %v709 = vpow.pop %v708
      %v710 = vmul.f32 %v662, 1.442695
      %v711 = vpow.pop %v710
      %v712 = vmul.f32 %v663, 1.442695
      %v713 = vpow.pop %v712
      %v714 = vmul.f32 %v664, 1.442695
      %v715 = vpow.pop %v714
      %v716 = vmul.f32 %v665, 1.442695
      %v717 = vpow.pop %v716
      %v718 = vmul.f32 %v666, 1.442695
      %v719 = vpow.pop %v718
      %v720 = vmul.f32 %v667, 1.442695
      %v721 = vpow.pop %v720
      %v722 = vmul.f32 %v668, 1.442695
      %v723 = vpow.pop %v722
      %v724 = vmul.f32 %v669, 1.442695
      %v725 = vpow.pop %v724
      %v726 = vmul.f32 %v670, 1.442695
      %v727 = vpow.pop %v726
      %v728 = vmul.f32 %v671, 1.442695
      %v729 = vpow.pop %v728
      %v730 = vmul.f32 %v672, 1.442695
      %v731 = vpow.pop %v730
      %v732 = vmul.f32 %v673, 1.442695
      %v733 = vpow.pop %v732
      %v734 = vmul.f32 %v674, 1.442695
      %v735 = vpow.pop %v734
      %v736 = vmul.f32 %v675, 1.442695
      %v737 = vpow.pop %v736
      %v738 = vmul.f32 %v676, 1.442695
      %v739 = vpow.pop %v738
      %v740 = vmul.f32 %v677, 1.442695
      %v741 = vpow.pop %v740
      %v742 = vadd.f32 %v679, %v681
      %743 = vadd.xlane.f32.xlu0 %v742
      %v744 = vpop.xlane.xlu0 %743
      %v745 = vadd.f32 %v683, %v685
      %746 = vadd.xlane.f32.xlu0 %v745
      %v747 = vpop.xlane.xlu0 %746
      %v748 = vadd.f32 %v687, %v689
      %749 = vadd.xlane.f32.xlu0 %v748
      %v750 = vpop.xlane.xlu0 %749
      %v751 = vadd.f32 %v691, %v693
      %752 = vadd.xlane.f32.xlu0 %v751
      %v753 = vpop.xlane.xlu0 %752
      %v754 = vadd.f32 %v695, %v697
      %755 = vadd.xlane.f32.xlu0 %v754
      %v756 = vpop.xlane.xlu0 %755
      %v757 = vadd.f32 %v699, %v701
      %758 = vadd.xlane.f32.xlu0 %v757
      %v759 = vpop.xlane.xlu0 %758
      %v760 = vadd.f32 %v703, %v705
      %761 = vadd.xlane.f32.xlu0 %v760
      %v762 = vpop.xlane.xlu0 %761
      %v763 = vadd.f32 %v707, %v709
      %764 = vadd.xlane.f32.xlu0 %v763
      %v765 = vpop.xlane.xlu0 %764
      %v766 = vadd.f32 %v711, %v713
      %767 = vadd.xlane.f32.xlu0 %v766
      %v768 = vpop.xlane.xlu0 %767
      %v769 = vadd.f32 %v715, %v717
      %770 = vadd.xlane.f32.xlu0 %v769
      %v771 = vpop.xlane.xlu0 %770
      %v772 = vadd.f32 %v719, %v721
      %773 = vadd.xlane.f32.xlu0 %v772
      %v774 = vpop.xlane.xlu0 %773
      %v775 = vadd.f32 %v723, %v725
      %776 = vadd.xlane.f32.xlu0 %v775
      %v777 = vpop.xlane.xlu0 %776
      %v778 = vadd.f32 %v727, %v729
      %779 = vadd.xlane.f32.xlu0 %v778
      %v780 = vpop.xlane.xlu0 %779
      %v781 = vadd.f32 %v731, %v733
      %782 = vadd.xlane.f32.xlu0 %v781
      %v783 = vpop.xlane.xlu0 %782
      %v784 = vadd.f32 %v735, %v737
      %785 = vadd.xlane.f32.xlu0 %v784
      %v786 = vpop.xlane.xlu0 %785
      %v787 = vadd.f32 %v739, %v741
      %788 = vadd.xlane.f32.xlu0 %v787
      %v789 = vpop.xlane.xlu0 %788
      %v790 = vrcp.pop %v744
      %v791 = vrcp.pop %v747
      %v792 = vrcp.pop %v750
      %v793 = vrcp.pop %v753
      %v794 = vrcp.pop %v756
      %v795 = vrcp.pop %v759
      %v796 = vrcp.pop %v762
      %v797 = vrcp.pop %v765
      %v798 = vrcp.pop %v768
      %v799 = vrcp.pop %v771
      %v800 = vrcp.pop %v774
      %v801 = vrcp.pop %v777
      %v802 = vrcp.pop %v780
      %v803 = vrcp.pop %v783
      %v804 = vrcp.pop %v786
      %v805 = vrcp.pop %v789
      %v806 = vmul.f32 %v679, %v790
      %v807 = vmul.f32 %v681, %v790
      %v808 = vmul.f32 %v683, %v791
      %v809 = vmul.f32 %v685, %v791
      %v810 = vmul.f32 %v687, %v792
      %v811 = vmul.f32 %v689, %v792
      %v812 = vmul.f32 %v691, %v793
      %v813 = vmul.f32 %v693, %v793
      %v814 = vmul.f32 %v695, %v794
      %v815 = vmul.f32 %v697, %v794
      %v816 = vmul.f32 %v699, %v795
      %v817 = vmul.f32 %v701, %v795
      %v818 = vmul.f32 %v703, %v796
      %v819 = vmul.f32 %v705, %v796
      %v820 = vmul.f32 %v707, %v797
      %v821 = vmul.f32 %v709, %v797
      %v822 = vmul.f32 %v711, %v798
      %v823 = vmul.f32 %v713, %v798
      %v824 = vmul.f32 %v715, %v799
      %v825 = vmul.f32 %v717, %v799
      %v826 = vmul.f32 %v719, %v800
      %v827 = vmul.f32 %v721, %v800
      %v828 = vmul.f32 %v723, %v801
      %v829 = vmul.f32 %v725, %v801
      %v830 = vmul.f32 %v727, %v802
      %v831 = vmul.f32 %v729, %v802
      %v832 = vmul.f32 %v731, %v803
      %v833 = vmul.f32 %v733, %v803
      %v834 = vmul.f32 %v735, %v804
      %v835 = vmul.f32 %v737, %v804
      %v836 = vmul.f32 %v739, %v805
      %v837 = vmul.f32 %v741, %v805
      %v838 = vld [vmem:[%s3] sm:$0xff]
      %v839 = vld [vmem:[%s3 + $0x8] sm:$0xff]
      %v840 = vld [vmem:[%s3 + $0x10] sm:$0xff]
      %v841 = vld [vmem:[%s3 + $0x18] sm:$0xff]
      %v842 = vld [vmem:[%s3 + $0x20] sm:$0xff]
      %v843 = vld [vmem:[%s3 + $0x28] sm:$0xff]
      %v844 = vld [vmem:[%s3 + $0x30] sm:$0xff]
      %v845 = vld [vmem:[%s3 + $0x38] sm:$0xff]
      %v846 = vld [vmem:[%s3 + $0x40] sm:$0xff]
      %v847 = vld [vmem:[%s3 + $0x48] sm:$0xff]
      %v848 = vld [vmem:[%s3 + $0x50] sm:$0xff]
      %v849 = vld [vmem:[%s3 + $0x58] sm:$0xff]
      %v850 = vld [vmem:[%s3 + $0x60] sm:$0xff]
      %v851 = vld [vmem:[%s3 + $0x68] sm:$0xff]
      %v852 = vld [vmem:[%s3 + $0x70] sm:$0xff]
      %v853 = vld [vmem:[%s3 + $0x78] sm:$0xff]
      %v854 = vld [vmem:[%s3 + $0x80] sm:$0xff]
      %v855 = vld [vmem:[%s3 + $0x88] sm:$0xff]
      %v856 = vld [vmem:[%s3 + $0x90] sm:$0xff]
      %v857 = vld [vmem:[%s3 + $0x98] sm:$0xff]
      %v858 = vld [vmem:[%s3 + $0xa0] sm:$0xff]
      %v859 = vld [vmem:[%s3 + $0xa8] sm:$0xff]
      %v860 = vld [vmem:[%s3 + $0xb0] sm:$0xff]
      %v861 = vld [vmem:[%s3 + $0xb8] sm:$0xff]
      %v862 = vld [vmem:[%s3 + $0xc0] sm:$0xff]
      %v863 = vld [vmem:[%s3 + $0xc8] sm:$0xff]
      %v864 = vld [vmem:[%s3 + $0xd0] sm:$0xff]
      %v865 = vld [vmem:[%s3 + $0xd8] sm:$0xff]
      %v866 = vld [vmem:[%s3 + $0xe0] sm:$0xff]
      %v867 = vld [vmem:[%s3 + $0xe8] sm:$0xff]
      %v868 = vld [vmem:[%s3 + $0xf0] sm:$0xff]
      %v869 = vld [vmem:[%s3 + $0xf8] sm:$0xff]
      %870 = vmatprep.subr.mxu0 0.0
      %871 = vmatpush1.msra.mxu0 %v853
      %872 = vmatprep.subr.mxu0 0.0
      %873 = vmatpush1.msra.mxu0 %v852
      %874 = vmatprep.subr.mxu0 0.0
      %875 = vmatpush1.msra.mxu0 %v851
      %876 = vmatprep.subr.mxu0 0.0
      %877 = vmatpush1.msra.mxu0 %v850
      %878 = vmatprep.subr.mxu0 0.0
      %879 = vmatpush1.msra.mxu0 %v849
      %880 = vmatprep.subr.mxu0 0.0
      %881 = vmatpush1.msra.mxu0 %v848
      %882 = vmatprep.subr.mxu0 0.0
      %883 = vmatpush1.msra.mxu0 %v847
      %884 = vmatprep.subr.mxu0 0.0
      %885 = vmatpush1.msra.mxu0 %v846
      %886 = vmatprep.subr.mxu0 0.0
      %887 = vmatpush1.msra.mxu0 %v845
      %888 = vmatprep.subr.mxu0 0.0
      %889 = vmatpush1.msra.mxu0 %v844
      %890 = vmatprep.subr.mxu0 0.0
      %891 = vmatpush1.msra.mxu0 %v843
      %892 = vmatprep.subr.mxu0 0.0
      %893 = vmatpush1.msra.mxu0 %v842
      %894 = vmatprep.subr.mxu0 0.0
      %895 = vmatpush1.msra.mxu0 %v841
      %896 = vmatprep.subr.mxu0 0.0
      %897 = vmatpush1.msra.mxu0 %v840
      %898 = vmatprep.subr.mxu0 0.0
      %899 = vmatpush1.msra.mxu0 %v839
      %900 = vmatprep.subr.mxu0 0.0
      %901 = vmatpush1.msra.mxu0 %v838
      %902 = vmatprep.subr.mxu0 0.0
      %903 = vmatpush2.msra.mxu0 %v869
      %904 = vmatprep.subr.mxu0 0.0
      %905 = vmatpush2.msra.mxu0 %v868
      %906 = vmatprep.subr.mxu0 0.0
      %907 = vmatpush2.msra.mxu0 %v867
      %908 = vmatprep.subr.mxu0 0.0
      %909 = vmatpush2.msra.mxu0 %v866
      %910 = vmatprep.subr.mxu0 0.0
      %911 = vmatpush2.msra.mxu0 %v865
      %912 = vmatprep.subr.mxu0 0.0
      %913 = vmatpush2.msra.mxu0 %v864
      %914 = vmatprep.subr.mxu0 0.0
      %915 = vmatpush2.msra.mxu0 %v863
      %916 = vmatprep.subr.mxu0 0.0
      %917 = vmatpush2.msra.mxu0 %v862
      %918 = vmatprep.subr.mxu0 0.0
      %919 = vmatpush2.msra.mxu0 %v861
      %920 = vmatprep.subr.mxu0 0.0
      %921 = vmatpush2.msra.mxu0 %v860
      %922 = vmatprep.subr.mxu0 0.0
      %923 = vmatpush2.msra.mxu0 %v859
      %924 = vmatprep.subr.mxu0 0.0
      %925 = vmatpush2.msra.mxu0 %v858
      %926 = vmatprep.subr.mxu0 0.0
      %927 = vmatpush2.msra.mxu0 %v857
      %928 = vmatprep.subr.mxu0 0.0
      %929 = vmatpush2.msra.mxu0 %v856
      %930 = vmatprep.subr.mxu0 0.0
      %931 = vmatpush2.msra.mxu0 %v855
      %932 = vmatprep.subr.mxu0 0.0
      %933 = vmatpush2.msra.mxu0 %v854
      %934 = vmatprep.mubr.f32.mxu0 %v807
      %935 = vmatmul.mubr.f32.gmra.mxu0 %v806
      %v936 = vpop.f32.mrf.mxu0
      %v937 = vadd.f32 0.0, %v936
      %v938 = vpop.f32.mrf.mxu0
      %939 = vmatprep.mubr.f32.mxu0 %v809
      %940 = vmatmul.mubr.f32.gmra.mxu0 %v808
      %v941 = vpop.f32.mrf.mxu0
      %v942 = vadd.f32 0.0, %v941
      %v943 = vpop.f32.mrf.mxu0
      %944 = vmatprep.mubr.f32.mxu0 %v811
      %945 = vmatmul.mubr.f32.gmra.mxu0 %v810
      %v946 = vpop.f32.mrf.mxu0
      %v947 = vadd.f32 0.0, %v946
      %v948 = vpop.f32.mrf.mxu0
      %949 = vmatprep.mubr.f32.mxu0 %v813
      %950 = vmatmul.mubr.f32.gmra.mxu0 %v812
      %v951 = vpop.f32.mrf.mxu0
      %v952 = vadd.f32 0.0, %v951
      %v953 = vpop.f32.mrf.mxu0
      %954 = vmatprep.mubr.f32.mxu0 %v815
      %955 = vmatmul.mubr.f32.gmra.mxu0 %v814
      %v956 = vpop.f32.mrf.mxu0
      %v957 = vadd.f32 0.0, %v956
      %v958 = vpop.f32.mrf.mxu0
      %959 = vmatprep.mubr.f32.mxu0 %v817
      %960 = vmatmul.mubr.f32.gmra.mxu0 %v816
      %v961 = vpop.f32.mrf.mxu0
      %v962 = vadd.f32 0.0, %v961
      %v963 = vpop.f32.mrf.mxu0
      %964 = vmatprep.mubr.f32.mxu0 %v819
      %965 = vmatmul.mubr.f32.gmra.mxu0 %v818
      %v966 = vpop.f32.mrf.mxu0
      %v967 = vadd.f32 0.0, %v966
      %v968 = vpop.f32.mrf.mxu0
      %969 = vmatprep.mubr.f32.mxu0 %v821
      %970 = vmatmul.mubr.f32.gmra.mxu0 %v820
      %v971 = vpop.f32.mrf.mxu0
      %v972 = vadd.f32 0.0, %v971
      %v973 = vpop.f32.mrf.mxu0
      %974 = vmatprep.mubr.f32.mxu0 %v823
      %975 = vmatmul.mubr.f32.gmra.mxu0 %v822
      %v976 = vpop.f32.mrf.mxu0
      %v977 = vadd.f32 0.0, %v976
      %v978 = vpop.f32.mrf.mxu0
      %979 = vmatprep.mubr.f32.mxu0 %v825
      %980 = vmatmul.mubr.f32.gmra.mxu0 %v824
      %v981 = vpop.f32.mrf.mxu0
      %v982 = vadd.f32 0.0, %v981
      %v983 = vpop.f32.mrf.mxu0
      %984 = vmatprep.mubr.f32.mxu0 %v827
      %985 = vmatmul.mubr.f32.gmra.mxu0 %v826
      %v986 = vpop.f32.mrf.mxu0
      %v987 = vadd.f32 0.0, %v986
      %v988 = vpop.f32.mrf.mxu0
      %989 = vmatprep.mubr.f32.mxu0 %v829
      %990 = vmatmul.mubr.f32.gmra.mxu0 %v828
      %v991 = vpop.f32.mrf.mxu0
      %v992 = vadd.f32 0.0, %v991
      %v993 = vpop.f32.mrf.mxu0
      %994 = vmatprep.mubr.f32.mxu0 %v831
      %995 = vmatmul.mubr.f32.gmra.mxu0 %v830
      %v996 = vpop.f32.mrf.mxu0
      %v997 = vadd.f32 0.0, %v996
      %v998 = vpop.f32.mrf.mxu0
      %999 = vmatprep.mubr.f32.mxu0 %v833
      %1000 = vmatmul.mubr.f32.gmra.mxu0 %v832
      %v1001 = vpop.f32.mrf.mxu0
      %v1002 = vadd.f32 0.0, %v1001
      %v1003 = vpop.f32.mrf.mxu0
      %1004 = vmatprep.mubr.f32.mxu0 %v835
      %1005 = vmatmul.mubr.f32.gmra.mxu0 %v834
      %v1006 = vpop.f32.mrf.mxu0
      %v1007 = vadd.f32 0.0, %v1006
      %v1008 = vpop.f32.mrf.mxu0
      %1009 = vmatprep.mubr.f32.mxu0 %v837
      %1010 = vmatmul.mubr.f32.gmra.mxu0 %v836
      %v1011 = vpop.f32.mrf.mxu0
      %v1012 = vadd.f32 0.0, %v1011
      %v1013 = vpop.f32.mrf.mxu0
      %1014 = vdwg.mxu0
      %vm1015 = vcmp.gt.f32.partialorder %v937, 0.0
      %vm1016 = vcmp.gt.f32.partialorder %v942, 0.0
      %vm1017 = vcmp.gt.f32.partialorder %v947, 0.0
      %vm1018 = vcmp.gt.f32.partialorder %v952, 0.0
      %vm1019 = vcmp.gt.f32.partialorder %v957, 0.0
      %vm1020 = vcmp.gt.f32.partialorder %v962, 0.0
      %vm1021 = vcmp.gt.f32.partialorder %v967, 0.0
      %vm1022 = vcmp.gt.f32.partialorder %v972, 0.0
      %vm1023 = vcmp.gt.f32.partialorder %v977, 0.0
      %vm1024 = vcmp.gt.f32.partialorder %v982, 0.0
      %vm1025 = vcmp.gt.f32.partialorder %v987, 0.0
      %vm1026 = vcmp.gt.f32.partialorder %v992, 0.0
      %vm1027 = vcmp.gt.f32.partialorder %v997, 0.0
      %vm1028 = vcmp.gt.f32.partialorder %v1002, 0.0
      %vm1029 = vcmp.gt.f32.partialorder %v1007, 0.0
      %vm1030 = vcmp.gt.f32.partialorder %v1012, 0.0
      %v1031 = vmin.f32 %v937, 0.0
      %v1032 = vmin.f32 %v942, 0.0
      %v1033 = vmin.f32 %v947, 0.0
      %v1034 = vmin.f32 %v952, 0.0
      %v1035 = vmin.f32 %v957, 0.0
      %v1036 = vmin.f32 %v962, 0.0
      %v1037 = vmin.f32 %v967, 0.0
      %v1038 = vmin.f32 %v972, 0.0
      %v1039 = vmin.f32 %v977, 0.0
      %v1040 = vmin.f32 %v982, 0.0
      %v1041 = vmin.f32 %v987, 0.0
      %v1042 = vmin.f32 %v992, 0.0
      %v1043 = vmin.f32 %v997, 0.0
      %v1044 = vmin.f32 %v1002, 0.0
      %v1045 = vmin.f32 %v1007, 0.0
      %v1046 = vmin.f32 %v1012, 0.0
      %v1047 = vmul.f32 %v1031, 1.442695
      %v1048 = vpow.pop %v1047
      %v1049 = vmul.f32 %v1032, 1.442695
      %v1050 = vpow.pop %v1049
      %v1051 = vmul.f32 %v1033, 1.442695
      %v1052 = vpow.pop %v1051
      %v1053 = vmul.f32 %v1034, 1.442695
      %v1054 = vpow.pop %v1053
      %v1055 = vmul.f32 %v1035, 1.442695
      %v1056 = vpow.pop %v1055
      %v1057 = vmul.f32 %v1036, 1.442695
      %v1058 = vpow.pop %v1057
      %v1059 = vmul.f32 %v1037, 1.442695
      %v1060 = vpow.pop %v1059
      %v1061 = vmul.f32 %v1038, 1.442695
      %v1062 = vpow.pop %v1061
      %v1063 = vmul.f32 %v1039, 1.442695
      %v1064 = vpow.pop %v1063
      %v1065 = vmul.f32 %v1040, 1.442695
      %v1066 = vpow.pop %v1065
      %v1067 = vmul.f32 %v1041, 1.442695
      %v1068 = vpow.pop %v1067
      %v1069 = vmul.f32 %v1042, 1.442695
      %v1070 = vpow.pop %v1069
      %v1071 = vmul.f32 %v1043, 1.442695
      %v1072 = vpow.pop %v1071
      %v1073 = vmul.f32 %v1044, 1.442695
      %v1074 = vpow.pop %v1073
      %v1075 = vmul.f32 %v1045, 1.442695
      %v1076 = vpow.pop %v1075
      %v1077 = vmul.f32 %v1046, 1.442695
      %v1078 = vpow.pop %v1077
      %v1079 = vsub.f32 %v1048, 1.0
      %v1080 = vsub.f32 %v1050, 1.0
      %v1081 = vsub.f32 %v1052, 1.0
      %v1082 = vsub.f32 %v1054, 1.0
      %v1083 = vsub.f32 %v1056, 1.0
      %v1084 = vsub.f32 %v1058, 1.0
      %v1085 = vsub.f32 %v1060, 1.0
      %v1086 = vsub.f32 %v1062, 1.0
      %v1087 = vsub.f32 %v1064, 1.0
      %v1088 = vsub.f32 %v1066, 1.0
      %v1089 = vsub.f32 %v1068, 1.0
      %v1090 = vsub.f32 %v1070, 1.0
      %v1091 = vsub.f32 %v1072, 1.0
      %v1092 = vsub.f32 %v1074, 1.0
      %v1093 = vsub.f32 %v1076, 1.0
      %v1094 = vsub.f32 %v1078, 1.0
      %v1095 = vsel %vm1015, %v937, %v1079
      %v1096 = vsel %vm1016, %v942, %v1080
      %v1097 = vsel %vm1017, %v947, %v1081
      %v1098 = vsel %vm1018, %v952, %v1082
      %v1099 = vsel %vm1019, %v957, %v1083
      %v1100 = vsel %vm1020, %v962, %v1084
      %v1101 = vsel %vm1021, %v967, %v1085
      %v1102 = vsel %vm1022, %v972, %v1086
      %v1103 = vsel %vm1023, %v977, %v1087
      %v1104 = vsel %vm1024, %v982, %v1088
      %v1105 = vsel %vm1025, %v987, %v1089
      %v1106 = vsel %vm1026, %v992, %v1090
      %v1107 = vsel %vm1027, %v997, %v1091
      %v1108 = vsel %vm1028, %v1002, %v1092
      %v1109 = vsel %vm1029, %v1007, %v1093
      %v1110 = vsel %vm1030, %v1012, %v1094
      %1111 = vst [vmem:[%s224] sm:$0xff] %v1095
      %1112 = vst [vmem:[%s224 + $0x8] sm:$0xff] %v1096
      %1113 = vst [vmem:[%s224 + $0x10] sm:$0xff] %v1097
      %1114 = vst [vmem:[%s224 + $0x18] sm:$0xff] %v1098
      %1115 = vst [vmem:[%s224 + $0x20] sm:$0xff] %v1099
      %1116 = vst [vmem:[%s224 + $0x28] sm:$0xff] %v1100
      %1117 = vst [vmem:[%s224 + $0x30] sm:$0xff] %v1101
      %1118 = vst [vmem:[%s224 + $0x38] sm:$0xff] %v1102
      %1119 = vst [vmem:[%s224 + $0x40] sm:$0xff] %v1103
      %1120 = vst [vmem:[%s224 + $0x48] sm:$0xff] %v1104
      %1121 = vst [vmem:[%s224 + $0x50] sm:$0xff] %v1105
      %1122 = vst [vmem:[%s224 + $0x58] sm:$0xff] %v1106
      %1123 = vst [vmem:[%s224 + $0x60] sm:$0xff] %v1107
      %1124 = vst [vmem:[%s224 + $0x68] sm:$0xff] %v1108
      %1125 = vst [vmem:[%s224 + $0x70] sm:$0xff] %v1109
      %1126 = vst [vmem:[%s224 + $0x78] sm:$0xff] %v1110
      %s1127 = smul.u32 16, %s15
      %p1128 = scmp.lt.s32.totalorder %s1127, 31
      %s1129 = scalar_select %p1128, %s1127, 31
      %s1130 = smul.addr %s1129, 8
      %s1131 = scalar_lea.vmem %s4, %s1130
      // Predicated region
      $region37: #{gat_forward.3} parent=35 // pred_check
        %p1132 = pneg %p127
      $region38: #{gat_forward.3} parent=35 // pred_check_branch
        %1134 = sbr.rel (%p1132) target = $region40
      $region39: #{gat_forward.3} parent=35 // pred_region
        %s1135 = smul.u32 16, %s15
      $region40: #{gat_forward.3} parent=35 // pred_fallthru
        _
    $region36: #{gat_forward.3} parent=5 // pred_fallthru
      _
    %p1136 = scmp.le.s32.totalorder 2, %s10
    // Predicated region
    $region41: #{gat_forward.3} parent=5 // pred_check
      %p1137 = pneg %p1136
    $region42: #{gat_forward.3} parent=5 // pred_check_branch
      %1139 = sbr.rel (%p1137) target = $region44
    $region43: #{gat_forward.3} parent=5 // pred_region
      %s1140 = ssub.s32 %s10, 2
      // Predicated region
      $region45: #{gat_forward.3} parent=43 // pred_check
        %p1141 = pneg %p133
      $region46: #{gat_forward.3} parent=43 // pred_check_branch
        %1143 = sbr.rel (%p1141) target = $region48
      $region47: #{gat_forward.3} parent=43 // pred_region
        %s1144 = smul.u32 16, %s16
        %p1145 = scmp.lt.s32.totalorder %s1144, 31
        %s1146 = scalar_select %p1145, %s1144, 31
        %s1147 = smul.addr %s1146, 8
        %s1148 = scalar_lea.vmem %s4, %s1147
      $region48: #{gat_forward.3} parent=43 // pred_fallthru
        _
    $region44: #{gat_forward.3} parent=5 // pred_fallthru
      _
  $region6: #{gat_forward.3} parent=0 // loop_footer
    %s14 = sadd.s32 1, %s10
  $region7: #{gat_forward.3} parent=0 // loop_footer_branch
    %9 = sbr.rel target = $region3
  $region8: #{gat_forward.3} parent=0 // loop_exit
    _

</llo_original>
